<compile_context>
chip_gen: v7x
topology: tpu7x:2x2x1
jax: 0.10.0
libtpu: 0.0.40
codegen_flags: <defaults>
</compile_context>

<pallas_src>
import functools

import numpy as np
import jax
import jax.numpy as jnp
from jax import lax
from jax.experimental import pallas as pl
from jax.experimental.pallas import tpu as pltpu

F32 = jnp.float32
NEG_INF = -1e30


def _leaky_relu(x, slope=0.2):
    return jnp.where(x >= 0, x, slope * x)


# ----------------------------------------------------------------------------
# Fused forward kernel: one grid step == one graph of the batch
# ----------------------------------------------------------------------------

def _fused_forward_kernel(xb_ref, eta_ref, hinc_ref, amean_ref, lgbias_ref,
                          w_enc_ref, gat_a_ref, proj_w_ref, sage_w_ref,
                          node_w0_ref, bias_ref, out_w_ref, out_ref,
                          *, n_edge_layers, n_node_layers):
    # ---- EdgeGCNV3: TSAEncoderV2 (fused time+attr projection, GAT attention) --
    # TODO(synk): TSAEncoderV2 / time_encoder source not provided; implemented as
    #             one fused linear projection of [et | ea] followed by
    #             single-head GAT-style attention over the line graph.
    h = jnp.dot(eta_ref[...], w_enc_ref[...], preferred_element_type=F32)   # (E, H)
    ga = gat_a_ref[...]                                                      # (2, H)
    d_col = lax.dot_general(h, ga[0:1, :], (((1,), (1,)), ((), ())),
                            preferred_element_type=F32)                     # (E, 1)
    s_row = lax.dot_general(ga[1:2, :], h, (((1,), (1,)), ((), ())),
                            preferred_element_type=F32)                     # (1, E)
    scores = _leaky_relu(d_col + s_row) + lgbias_ref[...]                    # (E, E)
    m = jnp.max(scores, axis=-1, keepdims=True)
    p = jnp.exp(scores - m)                 # masked entries underflow to exactly 0
    alpha = p / jnp.sum(p, axis=-1, keepdims=True)        # exact softmax
    tsae_out = jnp.dot(alpha, h, preferred_element_type=F32) + bias_ref[0]   # (E, H)

    # ---- EdgeToNodeConv + leaky_relu(0.2) + Linear (no bias) ------------------
    # TODO(synk): EdgeToNodeConv source not provided; implemented as incidence
    #             aggregation  H_inc @ edge_feats @ W.
    agg = jnp.dot(hinc_ref[...], tsae_out, preferred_element_type=F32)       # (N, H)
    z = _leaky_relu(jnp.dot(agg, proj_w_ref[0], preferred_element_type=F32))
    edge_repr = jnp.dot(z, proj_w_ref[1], preferred_element_type=F32)        # (N, H)

    a_mean = amean_ref[...]                                                  # (N, N)

    def sage_layer(val, w, b, relu):
        # one fused matmul: [neigh | self] @ [Wl; Wr] + b
        neigh = jnp.dot(a_mean, val, preferred_element_type=F32)
        nv = jnp.concatenate([neigh, val], axis=-1)
        val = jnp.dot(nv, w, preferred_element_type=F32) + b
        return jnp.maximum(val, 0.0) if relu else val     # ReLU between layers
        # dropout = eval-mode no-op

    # edge_aggr: SAGE(hidden, hidden, hidden, num_layers - 1)
    v = edge_repr
    for li in range(n_edge_layers):
        v = sage_layer(v, sage_w_ref[li], bias_ref[1 + li],
                       relu=li < n_edge_layers - 1)
    aggr_edge_repr = v                                                       # (N, H)

    # attr_node_model: SAGE(num_features, hidden, hidden, num_layers)
    v = sage_layer(xb_ref[...], node_w0_ref[...], bias_ref[1 + n_edge_layers],
                   relu=n_node_layers > 1)
    for li in range(1, n_node_layers):
        v = sage_layer(v, sage_w_ref[n_edge_layers + li - 1],
                       bias_ref[1 + n_edge_layers + li],
                       relu=li < n_node_layers - 1)
    node_repr = v                                                            # (N, H)

    # ---- MixAttention (gated mix of node / aggregated-edge representations) ---
    # TODO(synk): MixAttention source not provided; implemented as a learned
    #             sigmoid gate  g = sigma([node | edge] @ [Wq; Wk] + b),
    #             out = g * node + (1 - g) * edge.
    mix_w = sage_w_ref[n_edge_layers + n_node_layers - 1]
    mix_b = bias_ref[1 + n_edge_layers + n_node_layers]
    gate = jax.nn.sigmoid(
        jnp.dot(jnp.concatenate([node_repr, aggr_edge_repr], axis=-1), mix_w,
                preferred_element_type=F32) + mix_b)
    mixed = gate * node_repr + (1.0 - gate) * aggr_edge_repr                 # (N, H)

    # ---- Final Linear (no bias) + log_softmax(dim=1) ---------------------------
    logits = jnp.dot(mixed, out_w_ref[...], preferred_element_type=F32)      # (N, out)
    mmax = jnp.max(logits, axis=-1, keepdims=True)
    zz = logits - mmax
    lse = jnp.log(jnp.sum(jnp.exp(zz), axis=-1, keepdims=True))
    out_ref[...] = zz - lse


# ----------------------------------------------------------------------------
# Wrapper: one pallas_call, grid over the batch, weights VMEM-resident
# ----------------------------------------------------------------------------

def node_edge_aggregator_v4(params, xb, eta, hinc, amean, lgbias):
    B, N, num_feat = xb.shape
    E, TA = eta.shape[1], eta.shape[2]
    H = params["w_enc"].shape[1]
    OUT = params["out_w"].shape[1]
    n_edge_layers = params["n_edge_layers"]
    n_node_layers = params["n_node_layers"]

    graph_args = [xb, eta, hinc, amean, lgbias]
    weight_args = [params["w_enc"], params["gat_a"], params["proj_w"],
                   params["sage_w"], params["node_w0"], params["bias"],
                   params["out_w"]]

    def graph_spec(a):
        nd = a.ndim
        return pl.BlockSpec((None,) + a.shape[1:],
                            lambda b, _nd=nd: (b,) + (0,) * (_nd - 1))

    def weight_spec(a):
        nd = a.ndim
        # constant block index => DMA'd once, stays resident across the grid
        return pl.BlockSpec(a.shape, lambda b, _nd=nd: (0,) * _nd)

    in_specs = ([graph_spec(a) for a in graph_args]
                + [weight_spec(a) for a in weight_args])

    # Advisory cost estimate (whole batch) so XLA can overlap surrounding ops.
    flops = 2 * B * (
        E * TA * H + 2 * E * H + E * E * H + N * E * H + 2 * N * H * H
        + n_edge_layers * (N * N * H + 2 * N * H * H)
        + (N * N * num_feat + 2 * N * num_feat * H)
        + (n_node_layers - 1) * (N * N * H + 2 * N * H * H)
        + 2 * N * H * H + N * H * OUT)
    transcendentals = B * (E * E + N * H + N * OUT)
    all_args = graph_args + weight_args
    bytes_accessed = 4 * (sum(int(np.prod(a.shape)) for a in all_args)
                          + B * N * OUT)

    kernel = functools.partial(_fused_forward_kernel,
                               n_edge_layers=n_edge_layers,
                               n_node_layers=n_node_layers)
    return pl.pallas_call(
        kernel,
        grid=(B,),
        out_shape=jax.ShapeDtypeStruct((B, N, OUT), F32),
        in_specs=in_specs,
        out_specs=pl.BlockSpec((None, N, OUT), lambda b: (b, 0, 0)),
        compiler_params=pltpu.CompilerParams(
            dimension_semantics=("parallel",)),
        cost_estimate=pl.CostEstimate(flops=flops,
                                      transcendentals=transcendentals,
                                      bytes_accessed=bytes_accessed),
    )(*all_args)


# ----------------------------------------------------------------------------
# Parameter init (host-side packing of fused / stacked weights)
# ----------------------------------------------------------------------------

def glorot(key, shape):
    fan_in, fan_out = shape
    limit = np.sqrt(6.0 / (fan_in + fan_out))
    return jax.random.uniform(key, shape, F32, -limit, limit)


def init_params(key, timestamp_size, edge_attr_size, num_features, hidden,
                out_size, num_layers):
    n_edge_layers = num_layers - 1
    n_node_layers = num_layers
    keys = iter(jax.random.split(key, 16 + 2 * (n_edge_layers + n_node_layers)))

    # TSAEncoderV2: fused [w_time; w_ea]
    w_enc = jnp.concatenate([glorot(next(keys), (timestamp_size, hidden)),
                             glorot(next(keys), (edge_attr_size, hidden))], axis=0)
    # GAT attention vectors, row 0 = a_dst, row 1 = a_src
    gat_a = jnp.concatenate([glorot(next(keys), (1, hidden)),
                             glorot(next(keys), (1, hidden))], axis=0)
    # EdgeToNodeConv weight + EdgeGCNV3 output Linear (no bias), stacked
    proj_w = jnp.stack([glorot(next(keys), (hidden, hidden)),
                        glorot(next(keys), (hidden, hidden))], axis=0)

    def fused_sage_w(din):
        wl = glorot(next(keys), (din, hidden))   # neighbor branch
        wr = glorot(next(keys), (din, hidden))   # self branch
        return jnp.concatenate([wl, wr], axis=0)  # (2*din, hidden)

    # edge_aggr: SAGE(hidden, hidden, hidden, num_layers - 1)
    edge_ws = [fused_sage_w(hidden) for _ in range(n_edge_layers)]
    # attr_node_model: SAGE(num_features, hidden, hidden, num_layers)
    node_w0 = fused_sage_w(num_features)
    node_ws = [fused_sage_w(hidden) for _ in range(n_node_layers - 1)]
    # MixAttention gate weight [Wq; Wk]
    mix_w = fused_sage_w(hidden)
    sage_w = jnp.stack(edge_ws + node_ws + [mix_w], axis=0)   # (L_e+L_n, 2H, H)

    # biases stacked: [gat, edge layers..., node layers..., mix]
    bias = jnp.zeros((2 + n_edge_layers + n_node_layers, 1, hidden), F32)
    # final Linear(hidden, out_size, bias=False)
    out_w = glorot(next(keys), (hidden, out_size))

    return dict(w_enc=w_enc, gat_a=gat_a, proj_w=proj_w, sage_w=sage_w,
                node_w0=node_w0, bias=bias, out_w=out_w,
                n_edge_layers=n_edge_layers, n_node_layers=n_node_layers)


# ----------------------------------------------------------------------------
# Example run
# ----------------------------------------------------------------------------

if __name__ == "__main__":
    # args
    B = 2
    N_NODES = 16
    TIMESTAMP_SIZE = 4
    EDGE_ATTR_SIZE = 8
    NUM_FEATURES = 16
    HIDDEN = 32
    OUT_SIZE = 8
    NUM_LAYERS = 3

    # deterministic small directed graph: bidirectional ring + chords
    ring_s = np.arange(N_NODES)
    ring_d = (np.arange(N_NODES) + 1) % N_NODES
    chord_s = np.arange(0, N_NODES, 4)
    chord_d = (chord_s + 7) % N_NODES
    srcs = np.concatenate([ring_s, ring_d, chord_s, chord_d]).astype(np.int64)
    dsts = np.concatenate([ring_d, ring_s, chord_d, chord_s]).astype(np.int64)
    E = srcs.shape[0]  # 40 directed edges

    # dense mean-aggregation adjacency for SAGE: A[i, j] = 1/deg_in(i) for j->i
    a_raw = np.zeros((N_NODES, N_NODES), np.float32)
    a_raw[dsts, srcs] = 1.0
    deg = a_raw.sum(axis=1, keepdims=True)
    a_mean_np = a_raw / np.maximum(deg, 1.0)

    # line-graph adjacency (edge i -> edge j if dst(i) == src(j)), self-loops
    a_lg = np.zeros((E, E), np.float32)
    for i in range(E):
        for j in range(E):
            if dsts[i] == srcs[j]:
                a_lg[j, i] = 1.0
    np.fill_diagonal(a_lg, 1.0)
    lg_bias_np = np.where(a_lg > 0.0, 0.0, NEG_INF).astype(np.float32)

    # incidence matrix H: node x edge (both endpoints)
    H_inc_np = np.zeros((N_NODES, E), np.float32)
    H_inc_np[srcs, np.arange(E)] = 1.0
    H_inc_np[dsts, np.arange(E)] = 1.0

    key = jax.random.PRNGKey(0)
    k_x, k_et, k_ea, k_p = jax.random.split(key, 4)
    xb = jax.random.normal(k_x, (B, N_NODES, NUM_FEATURES), F32)
    et = jax.random.normal(k_et, (B, E, TIMESTAMP_SIZE), F32)
    ea = jax.random.normal(k_ea, (B, E, EDGE_ATTR_SIZE), F32)
    eta = jnp.concatenate([et, ea], axis=-1)           # host-side [et | ea] pack

    # same structure shared by both batch elements (features differ)
    hinc = jnp.asarray(np.broadcast_to(H_inc_np, (B, N_NODES, E)).copy())
    amean = jnp.asarray(np.broadcast_to(a_mean_np, (B, N_NODES, N_NODES)).copy())
    lgbias = jnp.asarray(np.broadcast_to(lg_bias_np, (B, E, E)).copy())

    params = init_params(k_p, TIMESTAMP_SIZE, EDGE_ATTR_SIZE, NUM_FEATURES,
                         HIDDEN, OUT_SIZE, NUM_LAYERS)

    out = node_edge_aggregator_v4(params, xb, eta, hinc, amean, lgbias)
    out = jax.block_until_ready(out)

    assert out.shape == (B, N_NODES, OUT_SIZE), out.shape
    assert bool(jnp.all(jnp.isfinite(out)))
    # rows of log_softmax must exp-sum to 1
    assert bool(jnp.allclose(jnp.sum(jnp.exp(out), axis=-1), 1.0, atol=1e-4))
    print("KERNEL_OK")
</pallas_src>

<mosaic_0001>
module attributes {stable_mosaic.version = 11 : i64} {
  func.func @_fused_forward_kernel(%arg0: i32, %arg1: memref<1x16x16xf32, #tpu.memory_space<vmem>>, %arg2: memref<1x40x12xf32, #tpu.memory_space<vmem>>, %arg3: memref<1x16x40xf32, #tpu.memory_space<vmem>>, %arg4: memref<1x16x16xf32, #tpu.memory_space<vmem>>, %arg5: memref<1x40x40xf32, #tpu.memory_space<vmem>>, %arg6: memref<12x32xf32, #tpu.memory_space<vmem>>, %arg7: memref<2x32xf32, #tpu.memory_space<vmem>>, %arg8: memref<2x32x32xf32, #tpu.memory_space<vmem>>, %arg9: memref<5x64x32xf32, #tpu.memory_space<vmem>>, %arg10: memref<32x32xf32, #tpu.memory_space<vmem>>, %arg11: memref<7x1x32xf32, #tpu.memory_space<vmem>>, %arg12: memref<32x8xf32, #tpu.memory_space<vmem>>, %arg13: memref<1x16x8xf32, #tpu.memory_space<vmem>>) attributes {dimension_semantics = [#tpu.dimension_semantics<parallel>], iteration_bounds = array<i64: 2>, scalar_prefetch = 0 : i64, scratch_operands = 0 : i64, tpu.core_type = #tpu.core_type<tc>, window_params = [{transform_indices = @transform_0, window_bounds = array<i64: 1, 16, 16>}, {transform_indices = @transform_1, window_bounds = array<i64: 1, 40, 12>}, {transform_indices = @transform_2, window_bounds = array<i64: 1, 16, 40>}, {transform_indices = @transform_3, window_bounds = array<i64: 1, 16, 16>}, {transform_indices = @transform_4, window_bounds = array<i64: 1, 40, 40>}, {pipeline_mode = #tpu.pipeline_mode<synchronous>, transform_indices = @transform_5, window_bounds = array<i64: 12, 32>}, {pipeline_mode = #tpu.pipeline_mode<synchronous>, transform_indices = @transform_6, window_bounds = array<i64: 2, 32>}, {pipeline_mode = #tpu.pipeline_mode<synchronous>, transform_indices = @transform_7, window_bounds = array<i64: 2, 32, 32>}, {pipeline_mode = #tpu.pipeline_mode<synchronous>, transform_indices = @transform_8, window_bounds = array<i64: 5, 64, 32>}, {pipeline_mode = #tpu.pipeline_mode<synchronous>, transform_indices = @transform_9, window_bounds = array<i64: 32, 32>}, {pipeline_mode = #tpu.pipeline_mode<synchronous>, transform_indices = @transform_10, window_bounds = array<i64: 7, 1, 32>}, {pipeline_mode = #tpu.pipeline_mode<synchronous>, transform_indices = @transform_11, window_bounds = array<i64: 32, 8>}, {transform_indices = @transform_12, window_bounds = array<i64: 1, 16, 8>}]} {
    %c0 = arith.constant 0 : index
    %c0_0 = arith.constant 0 : index
    %c0_1 = arith.constant 0 : index
    %0 = vector.load %arg2[%c0, %c0_0, %c0_1] : memref<1x40x12xf32, #tpu.memory_space<vmem>>, vector<1x40x12xf32>
    %1 = vector.shape_cast %0 : vector<1x40x12xf32> to vector<40x12xf32>
    %c0_2 = arith.constant 0 : index
    %c0_3 = arith.constant 0 : index
    %2 = vector.load %arg6[%c0_2, %c0_3] : memref<12x32xf32, #tpu.memory_space<vmem>>, vector<12x32xf32>
    %cst = arith.constant dense<0.000000e+00> : vector<40x32xf32>
    %3 = tpu.matmul %1, %2, %cst {dimension_numbers = #tpu.dot_dimension_numbers<[1], [0], [0], [1], [0, 0, 1, 1], [], []>} : vector<40x12xf32>, vector<12x32xf32>, vector<40x32xf32> -> vector<40x32xf32>
    %c0_4 = arith.constant 0 : index
    %c0_5 = arith.constant 0 : index
    %4 = vector.load %arg7[%c0_4, %c0_5] : memref<2x32xf32, #tpu.memory_space<vmem>>, vector<2x32xf32>
    %5 = vector.extract_strided_slice %4 {offsets = [0, 0], sizes = [1, 32], strides = [1, 1]} : vector<2x32xf32> to vector<1x32xf32>
    %cst_6 = arith.constant dense<0.000000e+00> : vector<40x1xf32>
    %6 = tpu.matmul %3, %5, %cst_6 {dimension_numbers = #tpu.dot_dimension_numbers<[1], [1], [0], [0], [0, 0, 1, 0], [], []>} : vector<40x32xf32>, vector<1x32xf32>, vector<40x1xf32> -> vector<40x1xf32>
    %7 = vector.extract_strided_slice %4 {offsets = [1, 0], sizes = [1, 32], strides = [1, 1]} : vector<2x32xf32> to vector<1x32xf32>
    %cst_7 = arith.constant dense<0.000000e+00> : vector<1x40xf32>
    %8 = tpu.matmul %7, %3, %cst_7 {dimension_numbers = #tpu.dot_dimension_numbers<[1], [1], [0], [0], [0, 0, 1, 0], [], []>} : vector<1x32xf32>, vector<40x32xf32>, vector<1x40xf32> -> vector<1x40xf32>
    %9 = vector.broadcast %6 : vector<40x1xf32> to vector<40x40xf32>
    %10 = vector.broadcast %8 : vector<1x40xf32> to vector<40x40xf32>
    %11 = arith.addf %9, %10 : vector<40x40xf32>
    %cst_8 = arith.constant 0.000000e+00 : f32
    %12 = vector.broadcast %cst_8 : f32 to vector<40x40xf32>
    %13 = arith.cmpf oge, %11, %12 : vector<40x40xf32>
    %cst_9 = arith.constant 2.000000e-01 : f32
    %14 = vector.broadcast %cst_9 : f32 to vector<40x40xf32>
    %15 = arith.mulf %14, %11 : vector<40x40xf32>
    %16 = arith.select %13, %11, %15 : vector<40x40xi1>, vector<40x40xf32>
    %c0_10 = arith.constant 0 : index
    %c0_11 = arith.constant 0 : index
    %c0_12 = arith.constant 0 : index
    %17 = vector.load %arg5[%c0_10, %c0_11, %c0_12] : memref<1x40x40xf32, #tpu.memory_space<vmem>>, vector<1x40x40xf32>
    %18 = vector.shape_cast %17 : vector<1x40x40xf32> to vector<40x40xf32>
    %19 = arith.addf %16, %18 : vector<40x40xf32>
    %cst_13 = arith.constant dense<0xFF800000> : vector<40xf32>
    %20 = vector.multi_reduction <maximumf>, %19, %cst_13 [1] : vector<40x40xf32> to vector<40xf32>
    %21 = vector.shape_cast %20 : vector<40xf32> to vector<40x1xf32>
    %22 = vector.broadcast %21 : vector<40x1xf32> to vector<40x40xf32>
    %23 = arith.subf %19, %22 : vector<40x40xf32>
    %24 = math.exp %23 : vector<40x40xf32>
    %cst_14 = arith.constant dense<0.000000e+00> : vector<40xf32>
    %25 = vector.multi_reduction <add>, %24, %cst_14 [1] : vector<40x40xf32> to vector<40xf32>
    %26 = vector.shape_cast %25 : vector<40xf32> to vector<40x1xf32>
    %27 = vector.broadcast %26 : vector<40x1xf32> to vector<40x40xf32>
    %28 = arith.divf %24, %27 : vector<40x40xf32>
    %cst_15 = arith.constant dense<0.000000e+00> : vector<40x32xf32>
    %29 = tpu.matmul %28, %3, %cst_15 {dimension_numbers = #tpu.dot_dimension_numbers<[1], [0], [0], [1], [0, 0, 1, 1], [], []>} : vector<40x40xf32>, vector<40x32xf32>, vector<40x32xf32> -> vector<40x32xf32>
    %c0_16 = arith.constant 0 : index
    %c0_17 = arith.constant 0 : index
    %c0_18 = arith.constant 0 : index
    %30 = vector.load %arg11[%c0_16, %c0_17, %c0_18] : memref<7x1x32xf32, #tpu.memory_space<vmem>>, vector<1x1x32xf32>
    %31 = vector.shape_cast %30 : vector<1x1x32xf32> to vector<1x32xf32>
    %32 = vector.broadcast %31 : vector<1x32xf32> to vector<40x32xf32>
    %33 = arith.addf %29, %32 : vector<40x32xf32>
    %c0_19 = arith.constant 0 : index
    %c0_20 = arith.constant 0 : index
    %c0_21 = arith.constant 0 : index
    %34 = vector.load %arg3[%c0_19, %c0_20, %c0_21] : memref<1x16x40xf32, #tpu.memory_space<vmem>>, vector<1x16x40xf32>
    %35 = vector.shape_cast %34 : vector<1x16x40xf32> to vector<16x40xf32>
    %cst_22 = arith.constant dense<0.000000e+00> : vector<16x32xf32>
    %36 = tpu.matmul %35, %33, %cst_22 {dimension_numbers = #tpu.dot_dimension_numbers<[1], [0], [0], [1], [0, 0, 1, 1], [], []>} : vector<16x40xf32>, vector<40x32xf32>, vector<16x32xf32> -> vector<16x32xf32>
    %c0_23 = arith.constant 0 : index
    %c0_24 = arith.constant 0 : index
    %c0_25 = arith.constant 0 : index
    %37 = vector.load %arg8[%c0_23, %c0_24, %c0_25] : memref<2x32x32xf32, #tpu.memory_space<vmem>>, vector<1x32x32xf32>
    %38 = vector.shape_cast %37 : vector<1x32x32xf32> to vector<32x32xf32>
    %cst_26 = arith.constant dense<0.000000e+00> : vector<16x32xf32>
    %39 = tpu.matmul %36, %38, %cst_26 {dimension_numbers = #tpu.dot_dimension_numbers<[1], [0], [0], [1], [0, 0, 1, 1], [], []>} : vector<16x32xf32>, vector<32x32xf32>, vector<16x32xf32> -> vector<16x32xf32>
    %cst_27 = arith.constant 0.000000e+00 : f32
    %40 = vector.broadcast %cst_27 : f32 to vector<16x32xf32>
    %41 = arith.cmpf oge, %39, %40 : vector<16x32xf32>
    %cst_28 = arith.constant 2.000000e-01 : f32
    %42 = vector.broadcast %cst_28 : f32 to vector<16x32xf32>
    %43 = arith.mulf %42, %39 : vector<16x32xf32>
    %44 = arith.select %41, %39, %43 : vector<16x32xi1>, vector<16x32xf32>
    %c1 = arith.constant 1 : index
    %c0_29 = arith.constant 0 : index
    %c0_30 = arith.constant 0 : index
    %45 = vector.load %arg8[%c1, %c0_29, %c0_30] : memref<2x32x32xf32, #tpu.memory_space<vmem>>, vector<1x32x32xf32>
    %46 = vector.shape_cast %45 : vector<1x32x32xf32> to vector<32x32xf32>
    %cst_31 = arith.constant dense<0.000000e+00> : vector<16x32xf32>
    %47 = tpu.matmul %44, %46, %cst_31 {dimension_numbers = #tpu.dot_dimension_numbers<[1], [0], [0], [1], [0, 0, 1, 1], [], []>} : vector<16x32xf32>, vector<32x32xf32>, vector<16x32xf32> -> vector<16x32xf32>
    %c0_32 = arith.constant 0 : index
    %c0_33 = arith.constant 0 : index
    %c0_34 = arith.constant 0 : index
    %48 = vector.load %arg4[%c0_32, %c0_33, %c0_34] : memref<1x16x16xf32, #tpu.memory_space<vmem>>, vector<1x16x16xf32>
    %49 = vector.shape_cast %48 : vector<1x16x16xf32> to vector<16x16xf32>
    %c0_35 = arith.constant 0 : index
    %c0_36 = arith.constant 0 : index
    %c0_37 = arith.constant 0 : index
    %50 = vector.load %arg9[%c0_35, %c0_36, %c0_37] : memref<5x64x32xf32, #tpu.memory_space<vmem>>, vector<1x64x32xf32>
    %51 = vector.shape_cast %50 : vector<1x64x32xf32> to vector<64x32xf32>
    %c1_38 = arith.constant 1 : index
    %c0_39 = arith.constant 0 : index
    %c0_40 = arith.constant 0 : index
    %52 = vector.load %arg11[%c1_38, %c0_39, %c0_40] : memref<7x1x32xf32, #tpu.memory_space<vmem>>, vector<1x1x32xf32>
    %53 = vector.shape_cast %52 : vector<1x1x32xf32> to vector<1x32xf32>
    %cst_41 = arith.constant dense<0.000000e+00> : vector<16x32xf32>
    %54 = tpu.matmul %49, %47, %cst_41 {dimension_numbers = #tpu.dot_dimension_numbers<[1], [0], [0], [1], [0, 0, 1, 1], [], []>} : vector<16x16xf32>, vector<16x32xf32>, vector<16x32xf32> -> vector<16x32xf32>
    %55 = tpu.concatenate %54, %47 in 1 : vector<16x32xf32>, vector<16x32xf32> -> vector<16x64xf32>
    %cst_42 = arith.constant dense<0.000000e+00> : vector<16x32xf32>
    %56 = tpu.matmul %55, %51, %cst_42 {dimension_numbers = #tpu.dot_dimension_numbers<[1], [0], [0], [1], [0, 0, 1, 1], [], []>} : vector<16x64xf32>, vector<64x32xf32>, vector<16x32xf32> -> vector<16x32xf32>
    %57 = vector.broadcast %53 : vector<1x32xf32> to vector<16x32xf32>
    %58 = arith.addf %56, %57 : vector<16x32xf32>
    %cst_43 = arith.constant 0.000000e+00 : f32
    %59 = vector.broadcast %cst_43 : f32 to vector<16x32xf32>
    %60 = arith.maximumf %58, %59 : vector<16x32xf32>
    %c1_44 = arith.constant 1 : index
    %c0_45 = arith.constant 0 : index
    %c0_46 = arith.constant 0 : index
    %61 = vector.load %arg9[%c1_44, %c0_45, %c0_46] : memref<5x64x32xf32, #tpu.memory_space<vmem>>, vector<1x64x32xf32>
    %62 = vector.shape_cast %61 : vector<1x64x32xf32> to vector<64x32xf32>
    %c2 = arith.constant 2 : index
    %c0_47 = arith.constant 0 : index
    %c0_48 = arith.constant 0 : index
    %63 = vector.load %arg11[%c2, %c0_47, %c0_48] : memref<7x1x32xf32, #tpu.memory_space<vmem>>, vector<1x1x32xf32>
    %64 = vector.shape_cast %63 : vector<1x1x32xf32> to vector<1x32xf32>
    %cst_49 = arith.constant dense<0.000000e+00> : vector<16x32xf32>
    %65 = tpu.matmul %49, %60, %cst_49 {dimension_numbers = #tpu.dot_dimension_numbers<[1], [0], [0], [1], [0, 0, 1, 1], [], []>} : vector<16x16xf32>, vector<16x32xf32>, vector<16x32xf32> -> vector<16x32xf32>
    %66 = tpu.concatenate %65, %60 in 1 : vector<16x32xf32>, vector<16x32xf32> -> vector<16x64xf32>
    %cst_50 = arith.constant dense<0.000000e+00> : vector<16x32xf32>
    %67 = tpu.matmul %66, %62, %cst_50 {dimension_numbers = #tpu.dot_dimension_numbers<[1], [0], [0], [1], [0, 0, 1, 1], [], []>} : vector<16x64xf32>, vector<64x32xf32>, vector<16x32xf32> -> vector<16x32xf32>
    %68 = vector.broadcast %64 : vector<1x32xf32> to vector<16x32xf32>
    %69 = arith.addf %67, %68 : vector<16x32xf32>
    %c0_51 = arith.constant 0 : index
    %c0_52 = arith.constant 0 : index
    %c0_53 = arith.constant 0 : index
    %70 = vector.load %arg1[%c0_51, %c0_52, %c0_53] : memref<1x16x16xf32, #tpu.memory_space<vmem>>, vector<1x16x16xf32>
    %71 = vector.shape_cast %70 : vector<1x16x16xf32> to vector<16x16xf32>
    %c0_54 = arith.constant 0 : index
    %c0_55 = arith.constant 0 : index
    %72 = vector.load %arg10[%c0_54, %c0_55] : memref<32x32xf32, #tpu.memory_space<vmem>>, vector<32x32xf32>
    %c3 = arith.constant 3 : index
    %c0_56 = arith.constant 0 : index
    %c0_57 = arith.constant 0 : index
    %73 = vector.load %arg11[%c3, %c0_56, %c0_57] : memref<7x1x32xf32, #tpu.memory_space<vmem>>, vector<1x1x32xf32>
    %74 = vector.shape_cast %73 : vector<1x1x32xf32> to vector<1x32xf32>
    %cst_58 = arith.constant dense<0.000000e+00> : vector<16x16xf32>
    %75 = tpu.matmul %49, %71, %cst_58 {dimension_numbers = #tpu.dot_dimension_numbers<[1], [0], [0], [1], [0, 0, 1, 1], [], []>} : vector<16x16xf32>, vector<16x16xf32>, vector<16x16xf32> -> vector<16x16xf32>
    %76 = tpu.concatenate %75, %71 in 1 : vector<16x16xf32>, vector<16x16xf32> -> vector<16x32xf32>
    %cst_59 = arith.constant dense<0.000000e+00> : vector<16x32xf32>
    %77 = tpu.matmul %76, %72, %cst_59 {dimension_numbers = #tpu.dot_dimension_numbers<[1], [0], [0], [1], [0, 0, 1, 1], [], []>} : vector<16x32xf32>, vector<32x32xf32>, vector<16x32xf32> -> vector<16x32xf32>
    %78 = vector.broadcast %74 : vector<1x32xf32> to vector<16x32xf32>
    %79 = arith.addf %77, %78 : vector<16x32xf32>
    %cst_60 = arith.constant 0.000000e+00 : f32
    %80 = vector.broadcast %cst_60 : f32 to vector<16x32xf32>
    %81 = arith.maximumf %79, %80 : vector<16x32xf32>
    %c2_61 = arith.constant 2 : index
    %c0_62 = arith.constant 0 : index
    %c0_63 = arith.constant 0 : index
    %82 = vector.load %arg9[%c2_61, %c0_62, %c0_63] : memref<5x64x32xf32, #tpu.memory_space<vmem>>, vector<1x64x32xf32>
    %83 = vector.shape_cast %82 : vector<1x64x32xf32> to vector<64x32xf32>
    %c4 = arith.constant 4 : index
    %c0_64 = arith.constant 0 : index
    %c0_65 = arith.constant 0 : index
    %84 = vector.load %arg11[%c4, %c0_64, %c0_65] : memref<7x1x32xf32, #tpu.memory_space<vmem>>, vector<1x1x32xf32>
    %85 = vector.shape_cast %84 : vector<1x1x32xf32> to vector<1x32xf32>
    %cst_66 = arith.constant dense<0.000000e+00> : vector<16x32xf32>
    %86 = tpu.matmul %49, %81, %cst_66 {dimension_numbers = #tpu.dot_dimension_numbers<[1], [0], [0], [1], [0, 0, 1, 1], [], []>} : vector<16x16xf32>, vector<16x32xf32>, vector<16x32xf32> -> vector<16x32xf32>
    %87 = tpu.concatenate %86, %81 in 1 : vector<16x32xf32>, vector<16x32xf32> -> vector<16x64xf32>
    %cst_67 = arith.constant dense<0.000000e+00> : vector<16x32xf32>
    %88 = tpu.matmul %87, %83, %cst_67 {dimension_numbers = #tpu.dot_dimension_numbers<[1], [0], [0], [1], [0, 0, 1, 1], [], []>} : vector<16x64xf32>, vector<64x32xf32>, vector<16x32xf32> -> vector<16x32xf32>
    %89 = vector.broadcast %85 : vector<1x32xf32> to vector<16x32xf32>
    %90 = arith.addf %88, %89 : vector<16x32xf32>
    %cst_68 = arith.constant 0.000000e+00 : f32
    %91 = vector.broadcast %cst_68 : f32 to vector<16x32xf32>
    %92 = arith.maximumf %90, %91 : vector<16x32xf32>
    %c3_69 = arith.constant 3 : index
    %c0_70 = arith.constant 0 : index
    %c0_71 = arith.constant 0 : index
    %93 = vector.load %arg9[%c3_69, %c0_70, %c0_71] : memref<5x64x32xf32, #tpu.memory_space<vmem>>, vector<1x64x32xf32>
    %94 = vector.shape_cast %93 : vector<1x64x32xf32> to vector<64x32xf32>
    %c5 = arith.constant 5 : index
    %c0_72 = arith.constant 0 : index
    %c0_73 = arith.constant 0 : index
    %95 = vector.load %arg11[%c5, %c0_72, %c0_73] : memref<7x1x32xf32, #tpu.memory_space<vmem>>, vector<1x1x32xf32>
    %96 = vector.shape_cast %95 : vector<1x1x32xf32> to vector<1x32xf32>
    %cst_74 = arith.constant dense<0.000000e+00> : vector<16x32xf32>
    %97 = tpu.matmul %49, %92, %cst_74 {dimension_numbers = #tpu.dot_dimension_numbers<[1], [0], [0], [1], [0, 0, 1, 1], [], []>} : vector<16x16xf32>, vector<16x32xf32>, vector<16x32xf32> -> vector<16x32xf32>
    %98 = tpu.concatenate %97, %92 in 1 : vector<16x32xf32>, vector<16x32xf32> -> vector<16x64xf32>
    %cst_75 = arith.constant dense<0.000000e+00> : vector<16x32xf32>
    %99 = tpu.matmul %98, %94, %cst_75 {dimension_numbers = #tpu.dot_dimension_numbers<[1], [0], [0], [1], [0, 0, 1, 1], [], []>} : vector<16x64xf32>, vector<64x32xf32>, vector<16x32xf32> -> vector<16x32xf32>
    %100 = vector.broadcast %96 : vector<1x32xf32> to vector<16x32xf32>
    %101 = arith.addf %99, %100 : vector<16x32xf32>
    %c4_76 = arith.constant 4 : index
    %c0_77 = arith.constant 0 : index
    %c0_78 = arith.constant 0 : index
    %102 = vector.load %arg9[%c4_76, %c0_77, %c0_78] : memref<5x64x32xf32, #tpu.memory_space<vmem>>, vector<1x64x32xf32>
    %103 = vector.shape_cast %102 : vector<1x64x32xf32> to vector<64x32xf32>
    %c6 = arith.constant 6 : index
    %c0_79 = arith.constant 0 : index
    %c0_80 = arith.constant 0 : index
    %104 = vector.load %arg11[%c6, %c0_79, %c0_80] : memref<7x1x32xf32, #tpu.memory_space<vmem>>, vector<1x1x32xf32>
    %105 = vector.shape_cast %104 : vector<1x1x32xf32> to vector<1x32xf32>
    %106 = tpu.concatenate %101, %69 in 1 : vector<16x32xf32>, vector<16x32xf32> -> vector<16x64xf32>
    %cst_81 = arith.constant dense<0.000000e+00> : vector<16x32xf32>
    %107 = tpu.matmul %106, %103, %cst_81 {dimension_numbers = #tpu.dot_dimension_numbers<[1], [0], [0], [1], [0, 0, 1, 1], [], []>} : vector<16x64xf32>, vector<64x32xf32>, vector<16x32xf32> -> vector<16x32xf32>
    %108 = vector.broadcast %105 : vector<1x32xf32> to vector<16x32xf32>
    %109 = arith.addf %107, %108 : vector<16x32xf32>
    %110 = arith.negf %109 : vector<16x32xf32>
    %111 = math.exp %110 : vector<16x32xf32>
    %cst_82 = arith.constant 1.000000e+00 : f32
    %112 = vector.broadcast %cst_82 : f32 to vector<16x32xf32>
    %113 = arith.addf %112, %111 : vector<16x32xf32>
    %114 = arith.divf %112, %113 : vector<16x32xf32>
    %115 = arith.mulf %114, %101 : vector<16x32xf32>
    %cst_83 = arith.constant 1.000000e+00 : f32
    %116 = vector.broadcast %cst_83 : f32 to vector<16x32xf32>
    %117 = arith.subf %116, %114 : vector<16x32xf32>
    %118 = arith.mulf %117, %69 : vector<16x32xf32>
    %119 = arith.addf %115, %118 : vector<16x32xf32>
    %c0_84 = arith.constant 0 : index
    %c0_85 = arith.constant 0 : index
    %120 = vector.load %arg12[%c0_84, %c0_85] : memref<32x8xf32, #tpu.memory_space<vmem>>, vector<32x8xf32>
    %cst_86 = arith.constant dense<0.000000e+00> : vector<16x8xf32>
    %121 = tpu.matmul %119, %120, %cst_86 {dimension_numbers = #tpu.dot_dimension_numbers<[1], [0], [0], [1], [0, 0, 1, 1], [], []>} : vector<16x32xf32>, vector<32x8xf32>, vector<16x8xf32> -> vector<16x8xf32>
    %cst_87 = arith.constant dense<0xFF800000> : vector<16xf32>
    %122 = vector.multi_reduction <maximumf>, %121, %cst_87 [1] : vector<16x8xf32> to vector<16xf32>
    %123 = vector.shape_cast %122 : vector<16xf32> to vector<16x1xf32>
    %124 = vector.broadcast %123 : vector<16x1xf32> to vector<16x8xf32>
    %125 = arith.subf %121, %124 : vector<16x8xf32>
    %126 = math.exp %125 : vector<16x8xf32>
    %cst_88 = arith.constant dense<0.000000e+00> : vector<16xf32>
    %127 = vector.multi_reduction <add>, %126, %cst_88 [1] : vector<16x8xf32> to vector<16xf32>
    %128 = vector.shape_cast %127 : vector<16xf32> to vector<16x1xf32>
    %129 = math.log %128 : vector<16x1xf32>
    %130 = vector.broadcast %129 : vector<16x1xf32> to vector<16x8xf32>
    %131 = arith.subf %125, %130 : vector<16x8xf32>
    %c0_89 = arith.constant 0 : index
    %c0_90 = arith.constant 0 : index
    %c0_91 = arith.constant 0 : index
    %132 = vector.load %arg13[%c0_89, %c0_90, %c0_91] : memref<1x16x8xf32, #tpu.memory_space<vmem>>, vector<1x16x8xf32>
    %133 = vector.shape_cast %132 : vector<1x16x8xf32> to vector<16x8xf32>
    %134 = vector.shape_cast %131 : vector<16x8xf32> to vector<1x16x8xf32>
    tpu.vector_store %arg13[%c0_89, %c0_90, %c0_91], %134 {strides = array<i32>} : memref<1x16x8xf32, #tpu.memory_space<vmem>>, vector<1x16x8xf32>,
    return
  }
  func.func @transform_0(%arg0: i32) -> (i32, i32, i32) {
    %c0_i32 = arith.constant 0 : i32
    %c0_i32_0 = arith.constant 0 : i32
    %c0_i32_1 = arith.constant 0 : i32
    return %arg0, %c0_i32, %c0_i32_0 : i32, i32, i32
  }
  func.func @transform_1(%arg0: i32) -> (i32, i32, i32) {
    %c0_i32 = arith.constant 0 : i32
    %c0_i32_0 = arith.constant 0 : i32
    %c0_i32_1 = arith.constant 0 : i32
    return %arg0, %c0_i32, %c0_i32_0 : i32, i32, i32
  }
  func.func @transform_2(%arg0: i32) -> (i32, i32, i32) {
    %c0_i32 = arith.constant 0 : i32
    %c0_i32_0 = arith.constant 0 : i32
    %c0_i32_1 = arith.constant 0 : i32
    return %arg0, %c0_i32, %c0_i32_0 : i32, i32, i32
  }
  func.func @transform_3(%arg0: i32) -> (i32, i32, i32) {
    %c0_i32 = arith.constant 0 : i32
    %c0_i32_0 = arith.constant 0 : i32
    %c0_i32_1 = arith.constant 0 : i32
    return %arg0, %c0_i32, %c0_i32_0 : i32, i32, i32
  }
  func.func @transform_4(%arg0: i32) -> (i32, i32, i32) {
    %c0_i32 = arith.constant 0 : i32
    %c0_i32_0 = arith.constant 0 : i32
    %c0_i32_1 = arith.constant 0 : i32
    return %arg0, %c0_i32, %c0_i32_0 : i32, i32, i32
  }
  func.func @transform_5(%arg0: i32) -> (i32, i32) {
    %c0_i32 = arith.constant 0 : i32
    %c0_i32_0 = arith.constant 0 : i32
    %c0_i32_1 = arith.constant 0 : i32
    return %c0_i32, %c0_i32_0 : i32, i32
  }
  func.func @transform_6(%arg0: i32) -> (i32, i32) {
    %c0_i32 = arith.constant 0 : i32
    %c0_i32_0 = arith.constant 0 : i32
    %c0_i32_1 = arith.constant 0 : i32
    return %c0_i32, %c0_i32_0 : i32, i32
  }
  func.func @transform_7(%arg0: i32) -> (i32, i32, i32) {
    %c0_i32 = arith.constant 0 : i32
    %c0_i32_0 = arith.constant 0 : i32
    %c0_i32_1 = arith.constant 0 : i32
    %c0_i32_2 = arith.constant 0 : i32
    return %c0_i32, %c0_i32_0, %c0_i32_1 : i32, i32, i32
  }
  func.func @transform_8(%arg0: i32) -> (i32, i32, i32) {
    %c0_i32 = arith.constant 0 : i32
    %c0_i32_0 = arith.constant 0 : i32
    %c0_i32_1 = arith.constant 0 : i32
    %c0_i32_2 = arith.constant 0 : i32
    return %c0_i32, %c0_i32_0, %c0_i32_1 : i32, i32, i32
  }
  func.func @transform_9(%arg0: i32) -> (i32, i32) {
    %c0_i32 = arith.constant 0 : i32
    %c0_i32_0 = arith.constant 0 : i32
    %c0_i32_1 = arith.constant 0 : i32
    return %c0_i32, %c0_i32_0 : i32, i32
  }
  func.func @transform_10(%arg0: i32) -> (i32, i32, i32) {
    %c0_i32 = arith.constant 0 : i32
    %c0_i32_0 = arith.constant 0 : i32
    %c0_i32_1 = arith.constant 0 : i32
    %c0_i32_2 = arith.constant 0 : i32
    return %c0_i32, %c0_i32_0, %c0_i32_1 : i32, i32, i32
  }
  func.func @transform_11(%arg0: i32) -> (i32, i32) {
    %c0_i32 = arith.constant 0 : i32
    %c0_i32_0 = arith.constant 0 : i32
    %c0_i32_1 = arith.constant 0 : i32
    return %c0_i32, %c0_i32_0 : i32, i32
  }
  func.func @transform_12(%arg0: i32) -> (i32, i32, i32) {
    %c0_i32 = arith.constant 0 : i32
    %c0_i32_0 = arith.constant 0 : i32
    %c0_i32_1 = arith.constant 0 : i32
    return %arg0, %c0_i32, %c0_i32_0 : i32, i32, i32
  }
}

</mosaic_0001>

<llo_original>
// kernel: tpu_custom_call.1
$region0: #{tpu_custom_call.1}
  #allocation0 [shape = 'u32[]', space=smem, size = 0x4, offset = 0x4, fixed_abs, tag = 'smem constant byte address 0x4 - core index']
  #allocation1 [shape = 'u32[144,128]{1,0:T(1,128)}', space=vmem, size = 0x12000, scoped, tag = 'internal scratch']
  %s0 = inlined_call_operand.vmem [shape: f32[2,16,16], index: 0, kind: input, shape index: {}]
  %s1 = inlined_call_operand.vmem [shape: f32[2,40,12], index: 1, kind: input, shape index: {}]
  %s2 = inlined_call_operand.vmem [shape: f32[2,16,40], index: 2, kind: input, shape index: {}]
  %s3 = inlined_call_operand.vmem [shape: f32[2,16,16], index: 3, kind: input, shape index: {}]
  %s4 = inlined_call_operand.vmem [shape: f32[2,40,40], index: 4, kind: input, shape index: {}]
  %s5 = inlined_call_operand.vmem [shape: f32[12,32], index: 5, kind: input, shape index: {}]
  %s6 = inlined_call_operand.vmem [shape: f32[2,32], index: 6, kind: input, shape index: {}]
  %s7 = inlined_call_operand.vmem [shape: f32[2,32,32], index: 7, kind: input, shape index: {}]
  %s8 = inlined_call_operand.vmem [shape: f32[5,64,32], index: 8, kind: input, shape index: {}]
  %s9 = inlined_call_operand.vmem [shape: f32[32,32], index: 9, kind: input, shape index: {}]
  %s10 = inlined_call_operand.vmem [shape: f32[7,1,32], index: 10, kind: input, shape index: {}]
  %s11 = inlined_call_operand.vmem [shape: f32[32,8], index: 11, kind: input, shape index: {}]
  %s12 = inlined_call_operand.vmem [shape: f32[2,16,8], index: 12, kind: output, shape index: {}]
  %s13 = sld [smem:[#allocation0]]
  $region81: #{tpu_custom_call.1} parent=0
    _
  %s15 = ssub.s32 1, %s13
  %s16 = scalar_select 0, %s15, %s13
  loop: start=0, step=1, limit=4
  $region2: #{tpu_custom_call.1} parent=0 // loop_pre_header
    _
  $region3: #{tpu_custom_call.1} parent=0 // loop_header
    %s18 = sphi 0, %s22
    %p19 = scmp.ge.s32.totalorder %s18, 4
    %s28 = sphi 0, %s30
    %s31 = sphi 0, %s28
    %s32 = sphi 0, %s31
    %s48 = sphi 0, %s32
    %s54 = sphi 0, %s56
    %s57 = sphi 0, %s54
    %s58 = sphi 0, %s57
    %s74 = sphi 0, %s58
    %s80 = sphi 0, %s82
    %s83 = sphi 0, %s80
    %s84 = sphi 0, %s83
    %s100 = sphi 0, %s84
    %s106 = sphi 0, %s108
    %s109 = sphi 0, %s106
    %s110 = sphi 0, %s109
    %s126 = sphi 0, %s110
    %s132 = sphi 0, %s134
    %s135 = sphi 0, %s132
    %s136 = sphi 0, %s135
    %s152 = sphi 0, %s136
    %s156 = sphi 0, %s156
    %s158 = sphi 0, %s156
    %s159 = sphi 0, %s158
    %s173 = sphi 0, %s159
    %s177 = sphi 0, %s177
    %s179 = sphi 0, %s177
    %s180 = sphi 0, %s179
    %s194 = sphi 0, %s180
    %s198 = sphi 0, %s198
    %s200 = sphi 0, %s198
    %s201 = sphi 0, %s200
    %s215 = sphi 0, %s201
    %s219 = sphi 0, %s219
    %s221 = sphi 0, %s219
    %s222 = sphi 0, %s221
    %s236 = sphi 0, %s222
    %s240 = sphi 0, %s240
    %s242 = sphi 0, %s240
    %s243 = sphi 0, %s242
    %s257 = sphi 0, %s243
    %s261 = sphi 0, %s261
    %s263 = sphi 0, %s261
    %s264 = sphi 0, %s263
    %s278 = sphi 0, %s264
    %s282 = sphi 0, %s282
    %s284 = sphi 0, %s282
    %s285 = sphi 0, %s284
    %s299 = sphi 0, %s285
    %s305 = sphi 0, %s307
    %s308 = sphi 0, %s305
    %s309 = sphi 0, %s308
    %s325 = sphi 0, %s309
  $region4: #{tpu_custom_call.1} parent=0 // loop_header_branch
    %21 = sbr.rel (%p19) target = $region8
  $region5: #{tpu_custom_call.1} parent=0 // loop_body
    %s23 = ssub.s32 %s18, 1
    %s24 = ssub.s32 %s18, 2
    %s25 = sadd.s32 %s18, 1
    %s26 = ssub.s32 %s18, %s25
    %p27 = scmp.eq.s32.totalorder %s26, 0
    %s29 = sadd.s32 %s28, 1
    %s30 = scalar_select %p27, %s28, %s29
    %p33 = pneg %p27
    %p34 = scmp.eq.s32.totalorder %s18, 1
    %p35 = por %p33, %p34
    %p36 = scmp.ne.s32.totalorder %s28, %s31
    %p37 = scmp.eq.s32.totalorder %s18, 0
    %p38 = por %p36, %p37
    %p39 = scmp.ne.s32.totalorder %s28, %s31
    %p40 = scmp.eq.s32.totalorder %s23, 1
    %p41 = por %p39, %p40
    %p42 = scmp.ne.s32.totalorder %s31, %s32
    %p43 = scmp.eq.s32.totalorder %s23, 0
    %p44 = por %p42, %p43
    %p45 = scmp.ne.s32.totalorder %s31, %s32
    %p46 = scmp.eq.s32.totalorder %s24, 1
    %p47 = por %p45, %p46
    %p49 = scmp.ne.s32.totalorder %s32, %s48
    %p50 = scmp.eq.s32.totalorder %s24, 0
    %p51 = por %p49, %p50
    %s52 = ssub.s32 %s18, %s25
    %p53 = scmp.eq.s32.totalorder %s52, 0
    %s55 = sadd.s32 %s54, 1
    %s56 = scalar_select %p53, %s54, %s55
    %p59 = pneg %p53
    %p60 = scmp.eq.s32.totalorder %s18, 1
    %p61 = por %p59, %p60
    %p62 = scmp.ne.s32.totalorder %s54, %s57
    %p63 = scmp.eq.s32.totalorder %s18, 0
    %p64 = por %p62, %p63
    %p65 = scmp.ne.s32.totalorder %s54, %s57
    %p66 = scmp.eq.s32.totalorder %s23, 1
    %p67 = por %p65, %p66
    %p68 = scmp.ne.s32.totalorder %s57, %s58
    %p69 = scmp.eq.s32.totalorder %s23, 0
    %p70 = por %p68, %p69
    %p71 = scmp.ne.s32.totalorder %s57, %s58
    %p72 = scmp.eq.s32.totalorder %s24, 1
    %p73 = por %p71, %p72
    %p75 = scmp.ne.s32.totalorder %s58, %s74
    %p76 = scmp.eq.s32.totalorder %s24, 0
    %p77 = por %p75, %p76
    %s78 = ssub.s32 %s18, %s25
    %p79 = scmp.eq.s32.totalorder %s78, 0
    %s81 = sadd.s32 %s80, 1
    %s82 = scalar_select %p79, %s80, %s81
    %p85 = pneg %p79
    %p86 = scmp.eq.s32.totalorder %s18, 1
    %p87 = por %p85, %p86
    %p88 = scmp.ne.s32.totalorder %s80, %s83
    %p89 = scmp.eq.s32.totalorder %s18, 0
    %p90 = por %p88, %p89
    %p91 = scmp.ne.s32.totalorder %s80, %s83
    %p92 = scmp.eq.s32.totalorder %s23, 1
    %p93 = por %p91, %p92
    %p94 = scmp.ne.s32.totalorder %s83, %s84
    %p95 = scmp.eq.s32.totalorder %s23, 0
    %p96 = por %p94, %p95
    %p97 = scmp.ne.s32.totalorder %s83, %s84
    %p98 = scmp.eq.s32.totalorder %s24, 1
    %p99 = por %p97, %p98
    %p101 = scmp.ne.s32.totalorder %s84, %s100
    %p102 = scmp.eq.s32.totalorder %s24, 0
    %p103 = por %p101, %p102
    %s104 = ssub.s32 %s18, %s25
    %p105 = scmp.eq.s32.totalorder %s104, 0
    %s107 = sadd.s32 %s106, 1
    %s108 = scalar_select %p105, %s106, %s107
    %p111 = pneg %p105
    %p112 = scmp.eq.s32.totalorder %s18, 1
    %p113 = por %p111, %p112
    %p114 = scmp.ne.s32.totalorder %s106, %s109
    %p115 = scmp.eq.s32.totalorder %s18, 0
    %p116 = por %p114, %p115
    %p117 = scmp.ne.s32.totalorder %s106, %s109
    %p118 = scmp.eq.s32.totalorder %s23, 1
    %p119 = por %p117, %p118
    %p120 = scmp.ne.s32.totalorder %s109, %s110
    %p121 = scmp.eq.s32.totalorder %s23, 0
    %p122 = por %p120, %p121
    %p123 = scmp.ne.s32.totalorder %s109, %s110
    %p124 = scmp.eq.s32.totalorder %s24, 1
    %p125 = por %p123, %p124
    %p127 = scmp.ne.s32.totalorder %s110, %s126
    %p128 = scmp.eq.s32.totalorder %s24, 0
    %p129 = por %p127, %p128
    %s130 = ssub.s32 %s18, %s25
    %p131 = scmp.eq.s32.totalorder %s130, 0
    %s133 = sadd.s32 %s132, 1
    %s134 = scalar_select %p131, %s132, %s133
    %p137 = pneg %p131
    %p138 = scmp.eq.s32.totalorder %s18, 1
    %p139 = por %p137, %p138
    %p140 = scmp.ne.s32.totalorder %s132, %s135
    %p141 = scmp.eq.s32.totalorder %s18, 0
    %p142 = por %p140, %p141
    %p143 = scmp.ne.s32.totalorder %s132, %s135
    %p144 = scmp.eq.s32.totalorder %s23, 1
    %p145 = por %p143, %p144
    %p146 = scmp.ne.s32.totalorder %s135, %s136
    %p147 = scmp.eq.s32.totalorder %s23, 0
    %p148 = por %p146, %p147
    %p149 = scmp.ne.s32.totalorder %s135, %s136
    %p150 = scmp.eq.s32.totalorder %s24, 1
    %p151 = por %p149, %p150
    %p153 = scmp.ne.s32.totalorder %s136, %s152
    %p154 = scmp.eq.s32.totalorder %s24, 0
    %p155 = por %p153, %p154
    %s157 = sadd.s32 %s156, 1
    %p160 = scmp.eq.s32.totalorder %s18, 1
    %p161 = scmp.ne.s32.totalorder %s156, %s158
    %p162 = scmp.eq.s32.totalorder %s18, 0
    %p163 = por %p161, %p162
    %p164 = scmp.ne.s32.totalorder %s156, %s158
    %p165 = scmp.eq.s32.totalorder %s23, 1
    %p166 = por %p164, %p165
    %p167 = scmp.ne.s32.totalorder %s158, %s159
    %p168 = scmp.eq.s32.totalorder %s23, 0
    %p169 = por %p167, %p168
    %p170 = scmp.ne.s32.totalorder %s158, %s159
    %p171 = scmp.eq.s32.totalorder %s24, 1
    %p172 = por %p170, %p171
    %p174 = scmp.ne.s32.totalorder %s159, %s173
    %p175 = scmp.eq.s32.totalorder %s24, 0
    %p176 = por %p174, %p175
    %s178 = sadd.s32 %s177, 1
    %p181 = scmp.eq.s32.totalorder %s18, 1
    %p182 = scmp.ne.s32.totalorder %s177, %s179
    %p183 = scmp.eq.s32.totalorder %s18, 0
    %p184 = por %p182, %p183
    %p185 = scmp.ne.s32.totalorder %s177, %s179
    %p186 = scmp.eq.s32.totalorder %s23, 1
    %p187 = por %p185, %p186
    %p188 = scmp.ne.s32.totalorder %s179, %s180
    %p189 = scmp.eq.s32.totalorder %s23, 0
    %p190 = por %p188, %p189
    %p191 = scmp.ne.s32.totalorder %s179, %s180
    %p192 = scmp.eq.s32.totalorder %s24, 1
    %p193 = por %p191, %p192
    %p195 = scmp.ne.s32.totalorder %s180, %s194
    %p196 = scmp.eq.s32.totalorder %s24, 0
    %p197 = por %p195, %p196
    %s199 = sadd.s32 %s198, 1
    %p202 = scmp.eq.s32.totalorder %s18, 1
    %p203 = scmp.ne.s32.totalorder %s198, %s200
    %p204 = scmp.eq.s32.totalorder %s18, 0
    %p205 = por %p203, %p204
    %p206 = scmp.ne.s32.totalorder %s198, %s200
    %p207 = scmp.eq.s32.totalorder %s23, 1
    %p208 = por %p206, %p207
    %p209 = scmp.ne.s32.totalorder %s200, %s201
    %p210 = scmp.eq.s32.totalorder %s23, 0
    %p211 = por %p209, %p210
    %p212 = scmp.ne.s32.totalorder %s200, %s201
    %p213 = scmp.eq.s32.totalorder %s24, 1
    %p214 = por %p212, %p213
    %p216 = scmp.ne.s32.totalorder %s201, %s215
    %p217 = scmp.eq.s32.totalorder %s24, 0
    %p218 = por %p216, %p217
    %s220 = sadd.s32 %s219, 1
    %p223 = scmp.eq.s32.totalorder %s18, 1
    %p224 = scmp.ne.s32.totalorder %s219, %s221
    %p225 = scmp.eq.s32.totalorder %s18, 0
    %p226 = por %p224, %p225
    %p227 = scmp.ne.s32.totalorder %s219, %s221
    %p228 = scmp.eq.s32.totalorder %s23, 1
    %p229 = por %p227, %p228
    %p230 = scmp.ne.s32.totalorder %s221, %s222
    %p231 = scmp.eq.s32.totalorder %s23, 0
    %p232 = por %p230, %p231
    %p233 = scmp.ne.s32.totalorder %s221, %s222
    %p234 = scmp.eq.s32.totalorder %s24, 1
    %p235 = por %p233, %p234
    %p237 = scmp.ne.s32.totalorder %s222, %s236
    %p238 = scmp.eq.s32.totalorder %s24, 0
    %p239 = por %p237, %p238
    %s241 = sadd.s32 %s240, 1
    %p244 = scmp.eq.s32.totalorder %s18, 1
    %p245 = scmp.ne.s32.totalorder %s240, %s242
    %p246 = scmp.eq.s32.totalorder %s18, 0
    %p247 = por %p245, %p246
    %p248 = scmp.ne.s32.totalorder %s240, %s242
    %p249 = scmp.eq.s32.totalorder %s23, 1
    %p250 = por %p248, %p249
    %p251 = scmp.ne.s32.totalorder %s242, %s243
    %p252 = scmp.eq.s32.totalorder %s23, 0
    %p253 = por %p251, %p252
    %p254 = scmp.ne.s32.totalorder %s242, %s243
    %p255 = scmp.eq.s32.totalorder %s24, 1
    %p256 = por %p254, %p255
    %p258 = scmp.ne.s32.totalorder %s243, %s257
    %p259 = scmp.eq.s32.totalorder %s24, 0
    %p260 = por %p258, %p259
    %s262 = sadd.s32 %s261, 1
    %p265 = scmp.eq.s32.totalorder %s18, 1
    %p266 = scmp.ne.s32.totalorder %s261, %s263
    %p267 = scmp.eq.s32.totalorder %s18, 0
    %p268 = por %p266, %p267
    %p269 = scmp.ne.s32.totalorder %s261, %s263
    %p270 = scmp.eq.s32.totalorder %s23, 1
    %p271 = por %p269, %p270
    %p272 = scmp.ne.s32.totalorder %s263, %s264
    %p273 = scmp.eq.s32.totalorder %s23, 0
    %p274 = por %p272, %p273
    %p275 = scmp.ne.s32.totalorder %s263, %s264
    %p276 = scmp.eq.s32.totalorder %s24, 1
    %p277 = por %p275, %p276
    %p279 = scmp.ne.s32.totalorder %s264, %s278
    %p280 = scmp.eq.s32.totalorder %s24, 0
    %p281 = por %p279, %p280
    %s283 = sadd.s32 %s282, 1
    %p286 = scmp.eq.s32.totalorder %s18, 1
    %p287 = scmp.ne.s32.totalorder %s282, %s284
    %p288 = scmp.eq.s32.totalorder %s18, 0
    %p289 = por %p287, %p288
    %p290 = scmp.ne.s32.totalorder %s282, %s284
    %p291 = scmp.eq.s32.totalorder %s23, 1
    %p292 = por %p290, %p291
    %p293 = scmp.ne.s32.totalorder %s284, %s285
    %p294 = scmp.eq.s32.totalorder %s23, 0
    %p295 = por %p293, %p294
    %p296 = scmp.ne.s32.totalorder %s284, %s285
    %p297 = scmp.eq.s32.totalorder %s24, 1
    %p298 = por %p296, %p297
    %p300 = scmp.ne.s32.totalorder %s285, %s299
    %p301 = scmp.eq.s32.totalorder %s24, 0
    %p302 = por %p300, %p301
    %s303 = ssub.s32 %s18, %s25
    %p304 = scmp.eq.s32.totalorder %s303, 0
    %s306 = sadd.s32 %s305, 1
    %s307 = scalar_select %p304, %s305, %s306
    %p310 = pneg %p304
    %p311 = scmp.eq.s32.totalorder %s18, 1
    %p312 = por %p310, %p311
    %p313 = scmp.ne.s32.totalorder %s305, %s308
    %p314 = scmp.eq.s32.totalorder %s18, 0
    %p315 = por %p313, %p314
    %p316 = scmp.ne.s32.totalorder %s305, %s308
    %p317 = scmp.eq.s32.totalorder %s23, 1
    %p318 = por %p316, %p317
    %p319 = scmp.ne.s32.totalorder %s308, %s309
    %p320 = scmp.eq.s32.totalorder %s23, 0
    %p321 = por %p319, %p320
    %p322 = scmp.ne.s32.totalorder %s308, %s309
    %p323 = scmp.eq.s32.totalorder %s24, 1
    %p324 = por %p322, %p323
    %p326 = scmp.ne.s32.totalorder %s309, %s325
    %p327 = scmp.eq.s32.totalorder %s24, 0
    %p328 = por %p326, %p327
    %p329 = scmp.le.s32.totalorder 1, %s18
    %p330 = scmp.lt.s32.totalorder %s18, 3
    %p331 = pnand %p329, %p330
    %p332 = pneg %p331
    // Predicated region
    $region9: #{tpu_custom_call.1} parent=5 // pred_check
      _
    $region10: #{tpu_custom_call.1} parent=5 // pred_check_branch
      %334 = sbr.rel (%p331) target = $region12
    $region11: #{tpu_custom_call.1} parent=5 // pred_region
      %s335 = ssub.s32 %s18, 1
      // Predicated region
      $region13: #{tpu_custom_call.1} parent=11 // pred_check
        %p336 = pneg %p169
      $region14: #{tpu_custom_call.1} parent=11 // pred_check_branch
        %338 = sbr.rel (%p336) target = $region16
      $region15: #{tpu_custom_call.1} parent=11 // pred_region
        _
      $region16: #{tpu_custom_call.1} parent=11 // pred_fallthru
        _
      // Predicated region
      $region17: #{tpu_custom_call.1} parent=11 // pred_check
        %p339 = pneg %p190
      $region18: #{tpu_custom_call.1} parent=11 // pred_check_branch
        %341 = sbr.rel (%p339) target = $region20
      $region19: #{tpu_custom_call.1} parent=11 // pred_region
        _
      $region20: #{tpu_custom_call.1} parent=11 // pred_fallthru
        _
      // Predicated region
      $region21: #{tpu_custom_call.1} parent=11 // pred_check
        %p342 = pneg %p211
      $region22: #{tpu_custom_call.1} parent=11 // pred_check_branch
        %344 = sbr.rel (%p342) target = $region24
      $region23: #{tpu_custom_call.1} parent=11 // pred_region
        _
      $region24: #{tpu_custom_call.1} parent=11 // pred_fallthru
        _
      // Predicated region
      $region25: #{tpu_custom_call.1} parent=11 // pred_check
        %p345 = pneg %p232
      $region26: #{tpu_custom_call.1} parent=11 // pred_check_branch
        %347 = sbr.rel (%p345) target = $region28
      $region27: #{tpu_custom_call.1} parent=11 // pred_region
        _
      $region28: #{tpu_custom_call.1} parent=11 // pred_fallthru
        _
      // Predicated region
      $region29: #{tpu_custom_call.1} parent=11 // pred_check
        %p348 = pneg %p253
      $region30: #{tpu_custom_call.1} parent=11 // pred_check_branch
        %350 = sbr.rel (%p348) target = $region32
      $region31: #{tpu_custom_call.1} parent=11 // pred_region
        _
      $region32: #{tpu_custom_call.1} parent=11 // pred_fallthru
        _
      // Predicated region
      $region33: #{tpu_custom_call.1} parent=11 // pred_check
        %p351 = pneg %p274
      $region34: #{tpu_custom_call.1} parent=11 // pred_check_branch
        %353 = sbr.rel (%p351) target = $region36
      $region35: #{tpu_custom_call.1} parent=11 // pred_region
        _
      $region36: #{tpu_custom_call.1} parent=11 // pred_fallthru
        _
      // Predicated region
      $region37: #{tpu_custom_call.1} parent=11 // pred_check
        %p354 = pneg %p295
      $region38: #{tpu_custom_call.1} parent=11 // pred_check_branch
        %356 = sbr.rel (%p354) target = $region40
      $region39: #{tpu_custom_call.1} parent=11 // pred_region
        _
      $region40: #{tpu_custom_call.1} parent=11 // pred_fallthru
        _
    $region12: #{tpu_custom_call.1} parent=5 // pred_fallthru
      _
    %p357 = scmp.lt.s32.totalorder %s18, 2
    // Predicated region
    $region41: #{tpu_custom_call.1} parent=5 // pred_check
      %p358 = pneg %p357
    $region42: #{tpu_custom_call.1} parent=5 // pred_check_branch
      %360 = sbr.rel (%p358) target = $region44
    $region43: #{tpu_custom_call.1} parent=5 // pred_region
      // Predicated region
      $region45: #{tpu_custom_call.1} parent=43 // pred_check
        %p361 = pneg %p38
      $region46: #{tpu_custom_call.1} parent=43 // pred_check_branch
        %363 = sbr.rel (%p361) target = $region48
      $region47: #{tpu_custom_call.1} parent=43 // pred_region
        %p364 = scmp.lt.s32.totalorder %s18, 1
        %s365 = scalar_select %p364, %s18, 1
        %s366 = smul.addr %s365, 2
        %s367 = smul.addr %s366, 8
        %s368 = scalar_lea.vmem %s0, %s367
      $region48: #{tpu_custom_call.1} parent=43 // pred_fallthru
        _
      // Predicated region
      $region49: #{tpu_custom_call.1} parent=43 // pred_check
        %p369 = pneg %p64
      $region50: #{tpu_custom_call.1} parent=43 // pred_check_branch
        %371 = sbr.rel (%p369) target = $region52
      $region51: #{tpu_custom_call.1} parent=43 // pred_region
        %p372 = scmp.lt.s32.totalorder %s18, 1
        %s373 = scalar_select %p372, %s18, 1
        %s374 = smul.addr %s373, 5
        %s375 = smul.addr %s374, 8
        %s376 = scalar_lea.vmem %s1, %s375
      $region52: #{tpu_custom_call.1} parent=43 // pred_fallthru
        _
      // Predicated region
      $region53: #{tpu_custom_call.1} parent=43 // pred_check
        %p377 = pneg %p90
      $region54: #{tpu_custom_call.1} parent=43 // pred_check_branch
        %379 = sbr.rel (%p377) target = $region56
      $region55: #{tpu_custom_call.1} parent=43 // pred_region
        %p380 = scmp.lt.s32.totalorder %s18, 1
        %s381 = scalar_select %p380, %s18, 1
        %s382 = smul.addr %s381, 2
        %s383 = smul.addr %s382, 8
        %s384 = scalar_lea.vmem %s2, %s383
      $region56: #{tpu_custom_call.1} parent=43 // pred_fallthru
        _
      // Predicated region
      $region57: #{tpu_custom_call.1} parent=43 // pred_check
        %p385 = pneg %p116
      $region58: #{tpu_custom_call.1} parent=43 // pred_check_branch
        %387 = sbr.rel (%p385) target = $region60
      $region59: #{tpu_custom_call.1} parent=43 // pred_region
        %p388 = scmp.lt.s32.totalorder %s18, 1
        %s389 = scalar_select %p388, %s18, 1
        %s390 = smul.addr %s389, 2
        %s391 = smul.addr %s390, 8
        %s392 = scalar_lea.vmem %s3, %s391
      $region60: #{tpu_custom_call.1} parent=43 // pred_fallthru
        _
      // Predicated region
      $region61: #{tpu_custom_call.1} parent=43 // pred_check
        %p393 = pneg %p142
      $region62: #{tpu_custom_call.1} parent=43 // pred_check_branch
        %395 = sbr.rel (%p393) target = $region64
      $region63: #{tpu_custom_call.1} parent=43 // pred_region
        %p396 = scmp.lt.s32.totalorder %s18, 1
        %s397 = scalar_select %p396, %s18, 1
        %s398 = smul.addr %s397, 5
        %s399 = smul.addr %s398, 8
        %s400 = scalar_lea.vmem %s4, %s399
      $region64: #{tpu_custom_call.1} parent=43 // pred_fallthru
        _
    $region44: #{tpu_custom_call.1} parent=5 // pred_fallthru
      _
    %p401 = scmp.le.s32.totalorder 1, %s18
    %p402 = scmp.lt.s32.totalorder %s18, 3
    %p403 = pnand %p401, %p402
    %p404 = pneg %p403
    // Predicated region
    $region65: #{tpu_custom_call.1} parent=5 // pred_check
      _
    $region66: #{tpu_custom_call.1} parent=5 // pred_check_branch
      %406 = sbr.rel (%p403) target = $region68
    $region67: #{tpu_custom_call.1} parent=5 // pred_region
      %s407 = ssub.s32 %s18, 1
      %p408 = scmp.lt.s32.totalorder %s23, 1
      %s409 = scalar_select %p408, %s23, 1
      %s410 = smul.addr %s409, 2
      %s411 = smul.addr %s410, 8
      %s412 = scalar_lea.vmem %s0, %s411
      %p413 = pneg %p44
      %p414 = pneg %p41
      %p415 = scmp.lt.s32.totalorder %s23, 1
      %s416 = scalar_select %p415, %s23, 1
      %s417 = smul.addr %s416, 5
      %s418 = smul.addr %s417, 8
      %s419 = scalar_lea.vmem %s1, %s418
      %p420 = pneg %p70
      %p421 = pneg %p67
      %p422 = scmp.lt.s32.totalorder %s23, 1
      %s423 = scalar_select %p422, %s23, 1
      %s424 = smul.addr %s423, 2
      %s425 = smul.addr %s424, 8
      %s426 = scalar_lea.vmem %s2, %s425
      %p427 = pneg %p96
      %p428 = pneg %p93
      %p429 = scmp.lt.s32.totalorder %s23, 1
      %s430 = scalar_select %p429, %s23, 1
      %s431 = smul.addr %s430, 2
      %s432 = smul.addr %s431, 8
      %s433 = scalar_lea.vmem %s3, %s432
      %p434 = pneg %p122
      %p435 = pneg %p119
      %p436 = scmp.lt.s32.totalorder %s23, 1
      %s437 = scalar_select %p436, %s23, 1
      %s438 = smul.addr %s437, 5
      %s439 = smul.addr %s438, 8
      %s440 = scalar_lea.vmem %s4, %s439
      %p441 = pneg %p148
      %p442 = pneg %p145
      %p443 = pneg %p169
      %p444 = pneg %p166
      %p445 = pneg %p190
      %p446 = pneg %p187
      %p447 = pneg %p211
      %p448 = pneg %p208
      %p449 = pneg %p232
      %p450 = pneg %p229
      %p451 = pneg %p253
      %p452 = pneg %p250
      %p453 = pneg %p274
      %p454 = pneg %p271
      %p455 = pneg %p295
      %p456 = pneg %p292
      %p457 = pneg %p321
      %p458 = pneg %p318
      %p459 = scmp.lt.s32.totalorder %s23, 1
      %s460 = scalar_select %p459, %s23, 1
      %s461 = smul.addr %s460, 2
      %s462 = smul.addr %s461, 8
      %s463 = scalar_lea.vmem %s12, %s462
      %p464 = scmp.lt.s32.totalorder %s23, 1
      %s465 = scalar_select %p464, %s23, 1
      %s466 = smul.addr %s465, 2
      %s467 = smul.addr %s466, 8
      %s468 = scalar_lea.vmem %s0, %s467
      %p469 = scmp.lt.s32.totalorder %s23, 1
      %s470 = scalar_select %p469, %s23, 1
      %s471 = smul.addr %s470, 5
      %s472 = smul.addr %s471, 8
      %s473 = scalar_lea.vmem %s1, %s472
      %p474 = scmp.lt.s32.totalorder %s23, 1
      %s475 = scalar_select %p474, %s23, 1
      %s476 = smul.addr %s475, 2
      %s477 = smul.addr %s476, 8
      %s478 = scalar_lea.vmem %s2, %s477
      %p479 = scmp.lt.s32.totalorder %s23, 1
      %s480 = scalar_select %p479, %s23, 1
      %s481 = smul.addr %s480, 2
      %s482 = smul.addr %s481, 8
      %s483 = scalar_lea.vmem %s3, %s482
      %p484 = scmp.lt.s32.totalorder %s23, 1
      %s485 = scalar_select %p484, %s23, 1
      %s486 = smul.addr %s485, 5
      %s487 = smul.addr %s486, 8
      %s488 = scalar_lea.vmem %s4, %s487
      %p489 = scmp.lt.s32.totalorder %s23, 1
      %s490 = scalar_select %p489, %s23, 1
      %s491 = smul.addr %s490, 2
      %s492 = smul.addr %s491, 8
      %s493 = scalar_lea.vmem %s12, %s492
      %v494 = vld [vmem:[%s473] sm:$0xff]
      %v495 = vld [vmem:[%s473 + $0x8] sm:$0xff]
      %v496 = vld [vmem:[%s473 + $0x10] sm:$0xff]
      %v497 = vld [vmem:[%s473 + $0x18] sm:$0xff]
      %v498 = vld [vmem:[%s473 + $0x20] sm:$0xff]
      %v499 = vld [vmem:[%s5] sm:$0xff]
      %v500 = vld [vmem:[%s5 + $0x8] sm:$0xf]
      %vm501 = vcmask 97280
      %v503 = vsel %vm501, %v494, 0
      %v506 = vsel %vm501, %v495, 0
      %v509 = vsel %vm501, %v496, 0
      %v512 = vsel %vm501, %v497, 0
      %v515 = vsel %vm501, %v498, 0
      %vm517 = vcmask 1043456
      %v519 = vsel %vm517, %v500, 0
      %521 = vmatprep.subr.mxu0 0.0
      %522 = vmatpush1.msra.mxu0 %v499
      %523 = vmatprep.subr.mxu0 0.0
      %524 = vmatpush1.msra.mxu0 %v519
      %525 = vmatprep.subr.mxu0 0.0
      %526 = vmatpush1.msra.mxu0 0.0
      %527 = vmatprep.subr.mxu0 0.0
      %528 = vmatpush1.msra.mxu0 0.0
      %529 = vmatprep.subr.mxu0 0.0
      %530 = vmatpush1.msra.mxu0 0.0
      %531 = vmatprep.subr.mxu0 0.0
      %532 = vmatpush1.msra.mxu0 0.0
      %533 = vmatprep.subr.mxu0 0.0
      %534 = vmatpush1.msra.mxu0 0.0
      %535 = vmatprep.subr.mxu0 0.0
      %536 = vmatpush1.msra.mxu0 0.0
      %537 = vmatprep.subr.mxu0 0.0
      %538 = vmatpush1.msra.mxu0 0.0
      %539 = vmatprep.subr.mxu0 0.0
      %540 = vmatpush1.msra.mxu0 0.0
      %541 = vmatprep.subr.mxu0 0.0
      %542 = vmatpush1.msra.mxu0 0.0
      %543 = vmatprep.subr.mxu0 0.0
      %544 = vmatpush1.msra.mxu0 0.0
      %545 = vmatprep.subr.mxu0 0.0
      %546 = vmatpush1.msra.mxu0 0.0
      %547 = vmatprep.subr.mxu0 0.0
      %548 = vmatpush1.msra.mxu0 0.0
      %549 = vmatprep.subr.mxu0 0.0
      %550 = vmatpush1.msra.mxu0 0.0
      %551 = vmatprep.subr.mxu0 0.0
      %552 = vmatpush1.msra.mxu0 0.0
      %553 = vmatprep.subr.mxu0 0.0
      %554 = vmatpush1.msra.mxu0 0.0
      %555 = vmatprep.subr.mxu0 0.0
      %556 = vmatpush1.msra.mxu0 0.0
      %557 = vmatprep.subr.mxu0 0.0
      %558 = vmatpush1.msra.mxu0 0.0
      %559 = vmatprep.subr.mxu0 0.0
      %560 = vmatpush1.msra.mxu0 0.0
      %561 = vmatprep.subr.mxu0 0.0
      %562 = vmatpush1.msra.mxu0 0.0
      %563 = vmatprep.subr.mxu0 0.0
      %564 = vmatpush1.msra.mxu0 0.0
      %565 = vmatprep.subr.mxu0 0.0
      %566 = vmatpush1.msra.mxu0 0.0
      %567 = vmatprep.subr.mxu0 0.0
      %568 = vmatpush1.msra.mxu0 0.0
      %569 = vmatprep.subr.mxu0 0.0
      %570 = vmatpush1.msra.mxu0 0.0
      %571 = vmatprep.subr.mxu0 0.0
      %572 = vmatpush1.msra.mxu0 0.0
      %573 = vmatprep.subr.mxu0 0.0
      %574 = vmatpush1.msra.mxu0 0.0
      %575 = vmatprep.subr.mxu0 0.0
      %576 = vmatpush1.msra.mxu0 0.0
      %577 = vmatprep.subr.mxu0 0.0
      %578 = vmatpush1.msra.mxu0 0.0
      %579 = vmatprep.subr.mxu0 0.0
      %580 = vmatpush1.msra.mxu0 0.0
      %581 = vmatprep.subr.mxu0 0.0
      %582 = vmatpush1.msra.mxu0 0.0
      %583 = vmatprep.subr.mxu0 0.0
      %584 = vmatpush1.msra.mxu0 0.0
      %585 = vmatprep.mubr.f32.mxu0 0.0
      %586 = vmatmul.mubr.f32.gmra.mrb[0].mxu0 %v503
      %v587 = vpop.f32.mrb[0].mxu0
      %v588 = vadd.f32 0.0, %v587
      %v589 = vpop.f32.mrb[0].mxu0
      %590 = vmatprep.mubr.f32.mxu0 0.0
      %591 = vmatmul.mubr.f32.gmra.mrb[0].mxu0 %v506
      %v592 = vpop.f32.mrb[0].mxu0
      %v593 = vadd.f32 0.0, %v592
      %v594 = vpop.f32.mrb[0].mxu0
      %595 = vmatprep.mubr.f32.mxu0 0.0
      %596 = vmatmul.mubr.f32.gmra.mrb[0].mxu0 %v509
      %v597 = vpop.f32.mrb[0].mxu0
      %v598 = vadd.f32 0.0, %v597
      %v599 = vpop.f32.mrb[0].mxu0
      %600 = vmatprep.mubr.f32.mxu0 0.0
      %601 = vmatmul.mubr.f32.gmra.mrb[0].mxu0 %v512
      %v602 = vpop.f32.mrb[0].mxu0
      %v603 = vadd.f32 0.0, %v602
      %v604 = vpop.f32.mrb[0].mxu0
      %605 = vmatprep.mubr.f32.mxu0 0.0
      %606 = vmatmul.mubr.f32.gmra.mrb[0].mxu0 %v515
      %v607 = vpop.f32.mrb[0].mxu0
      %v608 = vadd.f32 0.0, %v607
      %v609 = vpop.f32.mrb[0].mxu0
      %610 = vdwg.mxu0
      %v611 = vld [vmem:[%s6] sm:$0x3]
      %v612 = vlaneseq
      %v613 = vshrl.u32 %v612, 7
      %v614 = vsub.s32 0, %v613
      %v615 = vrot.slane %v611, %v614
      %v616 = vmul.f32 %v588, %v615
      %v617 = vmul.f32 %v593, %v615
      %v618 = vmul.f32 %v598, %v615
      %v619 = vmul.f32 %v603, %v615
      %v620 = vmul.f32 %v608, %v615
      %vm621 = vcmask 261120
      %v622 = vsel %vm621, %v616, 0.0
      %623 = vadd.xlane.f32.xlu0 %v622
      %v624 = vpop.xlane.xlu0 %623
      %v625 = vsel %vm621, %v617, 0.0
      %626 = vadd.xlane.f32.xlu0 %v625
      %v627 = vpop.xlane.xlu0 %626
      %v628 = vsel %vm621, %v618, 0.0
      %629 = vadd.xlane.f32.xlu0 %v628
      %v630 = vpop.xlane.xlu0 %629
      %v631 = vsel %vm621, %v619, 0.0
      %632 = vadd.xlane.f32.xlu0 %v631
      %v633 = vpop.xlane.xlu0 %632
      %v634 = vsel %vm621, %v620, 0.0
      %635 = vadd.xlane.f32.xlu0 %v634
      %v636 = vpop.xlane.xlu0 %635
      %v638 = vrot.slane %v611, 1
      %v639 = vsel %vm621, %v638, 0
      %v642 = vsel %vm621, %v588, 0
      %v645 = vsel %vm621, %v593, 0
      %v648 = vsel %vm621, %v598, 0
      %v651 = vsel %vm621, %v603, 0
      %v654 = vsel %vm621, %v608, 0
      %656 = vmatprep.subr.mxu0 0.0
      %657 = vmatpush1.xpose.msra.mxu0 %v642
      %658 = vmatprep.subr.mxu0 0.0
      %659 = vmatpush1.xpose.msra.mxu0 %v645
      %660 = vmatprep.subr.mxu0 0.0
      %661 = vmatpush1.xpose.msra.mxu0 %v648
      %662 = vmatprep.subr.mxu0 0.0
      %663 = vmatpush1.xpose.msra.mxu0 %v651
      %664 = vmatprep.subr.mxu0 0.0
      %665 = vmatpush1.xpose.msra.mxu0 %v654
      %666 = vmatprep.subr.mxu0 0.0
      %667 = vmatpush1.xpose.msra.mxu0 0.0
      %668 = vmatprep.subr.mxu0 0.0
      %669 = vmatpush1.xpose.msra.mxu0 0.0
      %670 = vmatprep.subr.mxu0 0.0
      %671 = vmatpush1.xpose.msra.mxu0 0.0
      %672 = vmatprep.subr.mxu0 0.0
      %673 = vmatpush1.xpose.msra.mxu0 0.0
      %674 = vmatprep.subr.mxu0 0.0
      %675 = vmatpush1.xpose.msra.mxu0 0.0
      %676 = vmatprep.subr.mxu0 0.0
      %677 = vmatpush1.xpose.msra.mxu0 0.0
      %678 = vmatprep.subr.mxu0 0.0
      %679 = vmatpush1.xpose.msra.mxu0 0.0
      %680 = vmatprep.subr.mxu0 0.0
      %681 = vmatpush1.xpose.msra.mxu0 0.0
      %682 = vmatprep.subr.mxu0 0.0
      %683 = vmatpush1.xpose.msra.mxu0 0.0
      %684 = vmatprep.subr.mxu0 0.0
      %685 = vmatpush1.xpose.msra.mxu0 0.0
      %686 = vmatprep.subr.mxu0 0.0
      %687 = vmatpush1.xpose.msra.mxu0 0.0
      %688 = vmatprep.subr.mxu0 0.0
      %689 = vmatpush1.xpose.msra.mxu0 0.0
      %690 = vmatprep.subr.mxu0 0.0
      %691 = vmatpush1.xpose.msra.mxu0 0.0
      %692 = vmatprep.subr.mxu0 0.0
      %693 = vmatpush1.xpose.msra.mxu0 0.0
      %694 = vmatprep.subr.mxu0 0.0
      %695 = vmatpush1.xpose.msra.mxu0 0.0
      %696 = vmatprep.subr.mxu0 0.0
      %697 = vmatpush1.xpose.msra.mxu0 0.0
      %698 = vmatprep.subr.mxu0 0.0
      %699 = vmatpush1.xpose.msra.mxu0 0.0
      %700 = vmatprep.subr.mxu0 0.0
      %701 = vmatpush1.xpose.msra.mxu0 0.0
      %702 = vmatprep.subr.mxu0 0.0
      %703 = vmatpush1.xpose.msra.mxu0 0.0
      %704 = vmatprep.subr.mxu0 0.0
      %705 = vmatpush1.xpose.msra.mxu0 0.0
      %706 = vmatprep.subr.mxu0 0.0
      %707 = vmatpush1.xpose.msra.mxu0 0.0
      %708 = vmatprep.subr.mxu0 0.0
      %709 = vmatpush1.xpose.msra.mxu0 0.0
      %710 = vmatprep.subr.mxu0 0.0
      %711 = vmatpush1.xpose.msra.mxu0 0.0
      %712 = vmatprep.subr.mxu0 0.0
      %713 = vmatpush1.xpose.msra.mxu0 0.0
      %714 = vmatprep.subr.mxu0 0.0
      %715 = vmatpush1.xpose.msra.mxu0 0.0
      %716 = vmatprep.subr.mxu0 0.0
      %717 = vmatpush1.xpose.msra.mxu0 0.0
      %718 = vmatprep.subr.mxu0 0.0
      %719 = vmatpush1.xpose.msra.mxu0 0.0
      %720 = vmatprep.mubr.f32.mxu0 0.0
      %721 = vmatmul.mubr.f32.gmra.mrb[0].mxu0 %v639
      %v722 = vpop.f32.mrb[0].mxu0
      %v723 = vadd.f32 0.0, %v722
      %v724 = vpop.f32.mrb[0].mxu0
      %725 = vdwg.mxu0
      %v726 = vlaneseq
      %v727 = vshrl.u32 %v726, 7
      %v728 = vsub.s32 0, %v727
      %v729 = vrot.slane %v723, %v728
      %v730 = vadd.f32 %v624, %v729
      %v731 = vadd.f32 %v627, %v729
      %v732 = vadd.f32 %v630, %v729
      %v733 = vadd.f32 %v633, %v729
      %v734 = vadd.f32 %v636, %v729
      %vm735 = vcmp.ge.f32.partialorder %v730, 0.0
      %vm736 = vcmp.ge.f32.partialorder %v731, 0.0
      %vm737 = vcmp.ge.f32.partialorder %v732, 0.0
      %vm738 = vcmp.ge.f32.partialorder %v733, 0.0
      %vm739 = vcmp.ge.f32.partialorder %v734, 0.0
      %v740 = vmul.f32 %v730, 0.2
      %v741 = vmul.f32 %v731, 0.2
      %v742 = vmul.f32 %v732, 0.2
      %v743 = vmul.f32 %v733, 0.2
      %v744 = vmul.f32 %v734, 0.2
      %v745 = vsel %vm735, %v730, %v740
      %v746 = vsel %vm736, %v731, %v741
      %v747 = vsel %vm737, %v732, %v742
      %v748 = vsel %vm738, %v733, %v743
      %v749 = vsel %vm739, %v734, %v744
      %v750 = vld [vmem:[%s488] sm:$0xff]
      %v751 = vld [vmem:[%s488 + $0x8] sm:$0xff]
      %v752 = vld [vmem:[%s488 + $0x10] sm:$0xff]
      %v753 = vld [vmem:[%s488 + $0x18] sm:$0xff]
      %v754 = vld [vmem:[%s488 + $0x20] sm:$0xff]
      %v755 = vadd.f32 %v745, %v750
      %v756 = vadd.f32 %v746, %v751
      %v757 = vadd.f32 %v747, %v752
      %v758 = vadd.f32 %v748, %v753
      %v759 = vadd.f32 %v749, %v754
      %vm760 = vcmask 326656
      %v761 = vsel %vm760, %v755, -inf
      %762 = vmax.xlane.f32.xlu0 %v761
      %v763 = vpop.xlane.xlu0 %762
      %v764 = vsel %vm760, %v756, -inf
      %765 = vmax.xlane.f32.xlu0 %v764
      %v766 = vpop.xlane.xlu0 %765
      %v767 = vsel %vm760, %v757, -inf
      %768 = vmax.xlane.f32.xlu0 %v767
      %v769 = vpop.xlane.xlu0 %768
      %v770 = vsel %vm760, %v758, -inf
      %771 = vmax.xlane.f32.xlu0 %v770
      %v772 = vpop.xlane.xlu0 %771
      %v773 = vsel %vm760, %v759, -inf
      %774 = vmax.xlane.f32.xlu0 %v773
      %v775 = vpop.xlane.xlu0 %774
      %v776 = vsub.f32 %v755, %v763
      %v777 = vsub.f32 %v756, %v766
      %v778 = vsub.f32 %v757, %v769
      %v779 = vsub.f32 %v758, %v772
      %v780 = vsub.f32 %v759, %v775
      %v781 = vmul.f32 %v776, 1.442695
      %v782 = vpow.pop %v781
      %v783 = vmul.f32 %v777, 1.442695
      %v784 = vpow.pop %v783
      %v785 = vmul.f32 %v778, 1.442695
      %v786 = vpow.pop %v785
      %v787 = vmul.f32 %v779, 1.442695
      %v788 = vpow.pop %v787
      %v789 = vmul.f32 %v780, 1.442695
      %v790 = vpow.pop %v789
      %v791 = vsel %vm760, %v782, 0.0
      %792 = vadd.xlane.f32.xlu0 %v791
      %v793 = vpop.xlane.xlu0 %792
      %v794 = vsel %vm760, %v784, 0.0
      %795 = vadd.xlane.f32.xlu0 %v794
      %v796 = vpop.xlane.xlu0 %795
      %v797 = vsel %vm760, %v786, 0.0
      %798 = vadd.xlane.f32.xlu0 %v797
      %v799 = vpop.xlane.xlu0 %798
      %v800 = vsel %vm760, %v788, 0.0
      %801 = vadd.xlane.f32.xlu0 %v800
      %v802 = vpop.xlane.xlu0 %801
      %v803 = vsel %vm760, %v790, 0.0
      %804 = vadd.xlane.f32.xlu0 %v803
      %v805 = vpop.xlane.xlu0 %804
      %v806 = vrcp.pop %v793
      %v807 = vmul.f32 %v782, %v806
      %v808 = vrcp.pop %v796
      %v809 = vmul.f32 %v784, %v808
      %v810 = vrcp.pop %v799
      %v811 = vmul.f32 %v786, %v810
      %v812 = vrcp.pop %v802
      %v813 = vmul.f32 %v788, %v812
      %v814 = vrcp.pop %v805
      %v815 = vmul.f32 %v790, %v814
      %v816 = vld [vmem:[%s10] sm:$0x1]
      %v818 = vlaneseq
      %v819 = vshrl.u32 %v818, 7
      %v820 = vsub.s32 0, %v819
      %v821 = vrot.slane %v816, %v820
      %v824 = vsel %vm760, %v807, 0
      %v827 = vsel %vm760, %v809, 0
      %v830 = vsel %vm760, %v811, 0
      %v833 = vsel %vm760, %v813, 0
      %v836 = vsel %vm760, %v815, 0
      %838 = vmatprep.subr.mxu0 0.0
      %839 = vmatpush1.msra.mxu0 %v588
      %840 = vmatprep.subr.mxu0 0.0
      %841 = vmatpush1.msra.mxu0 %v593
      %842 = vmatprep.subr.mxu0 0.0
      %843 = vmatpush1.msra.mxu0 %v598
      %844 = vmatprep.subr.mxu0 0.0
      %845 = vmatpush1.msra.mxu0 %v603
      %846 = vmatprep.subr.mxu0 0.0
      %847 = vmatpush1.msra.mxu0 %v608
      %848 = vmatprep.subr.mxu0 0.0
      %849 = vmatpush1.msra.mxu0 0.0
      %850 = vmatprep.subr.mxu0 0.0
      %851 = vmatpush1.msra.mxu0 0.0
      %852 = vmatprep.subr.mxu0 0.0
      %853 = vmatpush1.msra.mxu0 0.0
      %854 = vmatprep.subr.mxu0 0.0
      %855 = vmatpush1.msra.mxu0 0.0
      %856 = vmatprep.subr.mxu0 0.0
      %857 = vmatpush1.msra.mxu0 0.0
      %858 = vmatprep.subr.mxu0 0.0
      %859 = vmatpush1.msra.mxu0 0.0
      %860 = vmatprep.subr.mxu0 0.0
      %861 = vmatpush1.msra.mxu0 0.0
      %862 = vmatprep.subr.mxu0 0.0
      %863 = vmatpush1.msra.mxu0 0.0
      %864 = vmatprep.subr.mxu0 0.0
      %865 = vmatpush1.msra.mxu0 0.0
      %866 = vmatprep.subr.mxu0 0.0
      %867 = vmatpush1.msra.mxu0 0.0
      %868 = vmatprep.subr.mxu0 0.0
      %869 = vmatpush1.msra.mxu0 0.0
      %870 = vmatprep.subr.mxu0 0.0
      %871 = vmatpush1.msra.mxu0 0.0
      %872 = vmatprep.subr.mxu0 0.0
      %873 = vmatpush1.msra.mxu0 0.0
      %874 = vmatprep.subr.mxu0 0.0
      %875 = vmatpush1.msra.mxu0 0.0
      %876 = vmatprep.subr.mxu0 0.0
      %877 = vmatpush1.msra.mxu0 0.0
      %878 = vmatprep.subr.mxu0 0.0
      %879 = vmatpush1.msra.mxu0 0.0
      %880 = vmatprep.subr.mxu0 0.0
      %881 = vmatpush1.msra.mxu0 0.0
      %882 = vmatprep.subr.mxu0 0.0
      %883 = vmatpush1.msra.mxu0 0.0
      %884 = vmatprep.subr.mxu0 0.0
      %885 = vmatpush1.msra.mxu0 0.0
      %886 = vmatprep.subr.mxu0 0.0
      %887 = vmatpush1.msra.mxu0 0.0
      %888 = vmatprep.subr.mxu0 0.0
      %889 = vmatpush1.msra.mxu0 0.0
      %890 = vmatprep.subr.mxu0 0.0
      %891 = vmatpush1.msra.mxu0 0.0
      %892 = vmatprep.subr.mxu0 0.0
      %893 = vmatpush1.msra.mxu0 0.0
      %894 = vmatprep.subr.mxu0 0.0
      %895 = vmatpush1.msra.mxu0 0.0
      %896 = vmatprep.subr.mxu0 0.0
      %897 = vmatpush1.msra.mxu0 0.0
      %898 = vmatprep.subr.mxu0 0.0
      %899 = vmatpush1.msra.mxu0 0.0
      %900 = vmatprep.subr.mxu0 0.0
      %901 = vmatpush1.msra.mxu0 0.0
      %902 = vmatprep.mubr.f32.mxu0 0.0
      %903 = vmatmul.mubr.f32.gmra.mrb[0].mxu0 %v824
      %v904 = vpop.f32.mrb[0].mxu0
      %v905 = vadd.f32 %v821, %v904
      %v906 = vpop.f32.mrb[0].mxu0
      %907 = vmatprep.mubr.f32.mxu0 0.0
      %908 = vmatmul.mubr.f32.gmra.mrb[0].mxu0 %v827
      %v909 = vpop.f32.mrb[0].mxu0
      %v910 = vadd.f32 %v821, %v909
      %v911 = vpop.f32.mrb[0].mxu0
      %912 = vmatprep.mubr.f32.mxu0 0.0
      %913 = vmatmul.mubr.f32.gmra.mrb[0].mxu0 %v830
      %v914 = vpop.f32.mrb[0].mxu0
      %v915 = vadd.f32 %v821, %v914
      %v916 = vpop.f32.mrb[0].mxu0
      %917 = vmatprep.mubr.f32.mxu0 0.0
      %918 = vmatmul.mubr.f32.gmra.mrb[0].mxu0 %v833
      %v919 = vpop.f32.mrb[0].mxu0
      %v920 = vadd.f32 %v821, %v919
      %v921 = vpop.f32.mrb[0].mxu0
      %922 = vmatprep.mubr.f32.mxu0 0.0
      %923 = vmatmul.mubr.f32.gmra.mrb[0].mxu0 %v836
      %v924 = vpop.f32.mrb[0].mxu0
      %v925 = vadd.f32 %v821, %v924
      %v926 = vpop.f32.mrb[0].mxu0
      %927 = vdwg.mxu0
      %v928 = vld [vmem:[%s478] sm:$0xff]
      %v929 = vld [vmem:[%s478 + $0x8] sm:$0xff]
      %v931 = vsel %vm760, %v928, 0
      %v934 = vsel %vm760, %v929, 0
      %936 = vmatprep.subr.mxu0 0.0
      %937 = vmatpush1.msra.mxu0 %v905
      %938 = vmatprep.subr.mxu0 0.0
      %939 = vmatpush1.msra.mxu0 %v910
      %940 = vmatprep.subr.mxu0 0.0
      %941 = vmatpush1.msra.mxu0 %v915
      %942 = vmatprep.subr.mxu0 0.0
      %943 = vmatpush1.msra.mxu0 %v920
      %944 = vmatprep.subr.mxu0 0.0
      %945 = vmatpush1.msra.mxu0 %v925
      %946 = vmatprep.subr.mxu0 0.0
      %947 = vmatpush1.msra.mxu0 0.0
      %948 = vmatprep.subr.mxu0 0.0
      %949 = vmatpush1.msra.mxu0 0.0
      %950 = vmatprep.subr.mxu0 0.0
      %951 = vmatpush1.msra.mxu0 0.0
      %952 = vmatprep.subr.mxu0 0.0
      %953 = vmatpush1.msra.mxu0 0.0
      %954 = vmatprep.subr.mxu0 0.0
      %955 = vmatpush1.msra.mxu0 0.0
      %956 = vmatprep.subr.mxu0 0.0
      %957 = vmatpush1.msra.mxu0 0.0
      %958 = vmatprep.subr.mxu0 0.0
      %959 = vmatpush1.msra.mxu0 0.0
      %960 = vmatprep.subr.mxu0 0.0
      %961 = vmatpush1.msra.mxu0 0.0
      %962 = vmatprep.subr.mxu0 0.0
      %963 = vmatpush1.msra.mxu0 0.0
      %964 = vmatprep.subr.mxu0 0.0
      %965 = vmatpush1.msra.mxu0 0.0
      %966 = vmatprep.subr.mxu0 0.0
      %967 = vmatpush1.msra.mxu0 0.0
      %968 = vmatprep.subr.mxu0 0.0
      %969 = vmatpush1.msra.mxu0 0.0
      %970 = vmatprep.subr.mxu0 0.0
      %971 = vmatpush1.msra.mxu0 0.0
      %972 = vmatprep.subr.mxu0 0.0
      %973 = vmatpush1.msra.mxu0 0.0
      %974 = vmatprep.subr.mxu0 0.0
      %975 = vmatpush1.msra.mxu0 0.0
      %976 = vmatprep.subr.mxu0 0.0
      %977 = vmatpush1.msra.mxu0 0.0
      %978 = vmatprep.subr.mxu0 0.0
      %979 = vmatpush1.msra.mxu0 0.0
      %980 = vmatprep.subr.mxu0 0.0
      %981 = vmatpush1.msra.mxu0 0.0
      %982 = vmatprep.subr.mxu0 0.0
      %983 = vmatpush1.msra.mxu0 0.0
      %984 = vmatprep.subr.mxu0 0.0
      %985 = vmatpush1.msra.mxu0 0.0
      %986 = vmatprep.subr.mxu0 0.0
      %987 = vmatpush1.msra.mxu0 0.0
      %988 = vmatprep.subr.mxu0 0.0
      %989 = vmatpush1.msra.mxu0 0.0
      %990 = vmatprep.subr.mxu0 0.0
      %991 = vmatpush1.msra.mxu0 0.0
      %992 = vmatprep.subr.mxu0 0.0
      %993 = vmatpush1.msra.mxu0 0.0
      %994 = vmatprep.subr.mxu0 0.0
      %995 = vmatpush1.msra.mxu0 0.0
      %996 = vmatprep.subr.mxu0 0.0
      %997 = vmatpush1.msra.mxu0 0.0
      %998 = vmatprep.subr.mxu0 0.0
      %999 = vmatpush1.msra.mxu0 0.0
      %1000 = vmatprep.mubr.f32.mxu0 0.0
      %1001 = vmatmul.mubr.f32.gmra.mrb[0].mxu0 %v931
      %v1002 = vpop.f32.mrb[0].mxu0
      %v1003 = vadd.f32 0.0, %v1002
      %v1004 = vpop.f32.mrb[0].mxu0
      %1005 = vmatprep.mubr.f32.mxu0 0.0
      %1006 = vmatmul.mubr.f32.gmra.mrb[0].mxu0 %v934
      %v1007 = vpop.f32.mrb[0].mxu0
      %v1008 = vadd.f32 0.0, %v1007
      %v1009 = vpop.f32.mrb[0].mxu0
      %1010 = vdwg.mxu0
      %v1011 = vld [vmem:[%s7] sm:$0xff]
      %v1012 = vld [vmem:[%s7 + $0x8] sm:$0xff]
      %v1013 = vld [vmem:[%s7 + $0x10] sm:$0xff]
      %v1014 = vld [vmem:[%s7 + $0x18] sm:$0xff]
      %v1016 = vsel %vm621, %v1003, 0
      %v1019 = vsel %vm621, %v1008, 0
      %1021 = vmatprep.subr.mxu0 0.0
      %1022 = vmatpush1.msra.mxu0 %v1011
      %1023 = vmatprep.subr.mxu0 0.0
      %1024 = vmatpush1.msra.mxu0 %v1012
      %1025 = vmatprep.subr.mxu0 0.0
      %1026 = vmatpush1.msra.mxu0 %v1013
      %1027 = vmatprep.subr.mxu0 0.0
      %1028 = vmatpush1.msra.mxu0 %v1014
      %1029 = vmatprep.subr.mxu0 0.0
      %1030 = vmatpush1.msra.mxu0 0.0
      %1031 = vmatprep.subr.mxu0 0.0
      %1032 = vmatpush1.msra.mxu0 0.0
      %1033 = vmatprep.subr.mxu0 0.0
      %1034 = vmatpush1.msra.mxu0 0.0
      %1035 = vmatprep.subr.mxu0 0.0
      %1036 = vmatpush1.msra.mxu0 0.0
      %1037 = vmatprep.subr.mxu0 0.0
      %1038 = vmatpush1.msra.mxu0 0.0
      %1039 = vmatprep.subr.mxu0 0.0
      %1040 = vmatpush1.msra.mxu0 0.0
      %1041 = vmatprep.subr.mxu0 0.0
      %1042 = vmatpush1.msra.mxu0 0.0
      %1043 = vmatprep.subr.mxu0 0.0
      %1044 = vmatpush1.msra.mxu0 0.0
      %1045 = vmatprep.subr.mxu0 0.0
      %1046 = vmatpush1.msra.mxu0 0.0
      %1047 = vmatprep.subr.mxu0 0.0
      %1048 = vmatpush1.msra.mxu0 0.0
      %1049 = vmatprep.subr.mxu0 0.0
      %1050 = vmatpush1.msra.mxu0 0.0
      %1051 = vmatprep.subr.mxu0 0.0
      %1052 = vmatpush1.msra.mxu0 0.0
      %1053 = vmatprep.subr.mxu0 0.0
      %1054 = vmatpush1.msra.mxu0 0.0
      %1055 = vmatprep.subr.mxu0 0.0
      %1056 = vmatpush1.msra.mxu0 0.0
      %1057 = vmatprep.subr.mxu0 0.0
      %1058 = vmatpush1.msra.mxu0 0.0
      %1059 = vmatprep.subr.mxu0 0.0
      %1060 = vmatpush1.msra.mxu0 0.0
      %1061 = vmatprep.subr.mxu0 0.0
      %1062 = vmatpush1.msra.mxu0 0.0
      %1063 = vmatprep.subr.mxu0 0.0
      %1064 = vmatpush1.msra.mxu0 0.0
      %1065 = vmatprep.subr.mxu0 0.0
      %1066 = vmatpush1.msra.mxu0 0.0
      %1067 = vmatprep.subr.mxu0 0.0
      %1068 = vmatpush1.msra.mxu0 0.0
      %1069 = vmatprep.subr.mxu0 0.0
      %1070 = vmatpush1.msra.mxu0 0.0
      %1071 = vmatprep.subr.mxu0 0.0
      %1072 = vmatpush1.msra.mxu0 0.0
      %1073 = vmatprep.subr.mxu0 0.0
      %1074 = vmatpush1.msra.mxu0 0.0
      %1075 = vmatprep.subr.mxu0 0.0
      %1076 = vmatpush1.msra.mxu0 0.0
      %1077 = vmatprep.subr.mxu0 0.0
      %1078 = vmatpush1.msra.mxu0 0.0
      %1079 = vmatprep.subr.mxu0 0.0
      %1080 = vmatpush1.msra.mxu0 0.0
      %1081 = vmatprep.subr.mxu0 0.0
      %1082 = vmatpush1.msra.mxu0 0.0
      %1083 = vmatprep.subr.mxu0 0.0
      %1084 = vmatpush1.msra.mxu0 0.0
      %1085 = vmatprep.mubr.f32.mxu0 0.0
      %1086 = vmatmul.mubr.f32.gmra.mrb[0].mxu0 %v1016
      %v1087 = vpop.f32.mrb[0].mxu0
      %v1088 = vadd.f32 0.0, %v1087
      %v1089 = vpop.f32.mrb[0].mxu0
      %1090 = vmatprep.mubr.f32.mxu0 0.0
      %1091 = vmatmul.mubr.f32.gmra.mrb[0].mxu0 %v1019
      %v1092 = vpop.f32.mrb[0].mxu0
      %v1093 = vadd.f32 0.0, %v1092
      %v1094 = vpop.f32.mrb[0].mxu0
      %1095 = vdwg.mxu0
      %vm1096 = vcmp.ge.f32.partialorder %v1088, 0.0
      %vm1097 = vcmp.ge.f32.partialorder %v1093, 0.0
      %v1098 = vmul.f32 %v1088, 0.2
      %v1099 = vmul.f32 %v1093, 0.2
      %v1100 = vsel %vm1096, %v1088, %v1098
      %v1101 = vsel %vm1097, %v1093, %v1099
      %s1102 = scalar_lea.vmem %s7, 32
      %v1103 = vld [vmem:[%s1102] sm:$0xff]
      %v1104 = vld [vmem:[%s1102 + $0x8] sm:$0xff]
      %v1105 = vld [vmem:[%s1102 + $0x10] sm:$0xff]
      %v1106 = vld [vmem:[%s1102 + $0x18] sm:$0xff]
      %v1108 = vsel %vm621, %v1100, 0
      %v1111 = vsel %vm621, %v1101, 0
      %1113 = vmatprep.subr.mxu0 0.0
      %1114 = vmatpush1.msra.mxu0 %v1103
      %1115 = vmatprep.subr.mxu0 0.0
      %1116 = vmatpush1.msra.mxu0 %v1104
      %1117 = vmatprep.subr.mxu0 0.0
      %1118 = vmatpush1.msra.mxu0 %v1105
      %1119 = vmatprep.subr.mxu0 0.0
      %1120 = vmatpush1.msra.mxu0 %v1106
      %1121 = vmatprep.subr.mxu0 0.0
      %1122 = vmatpush1.msra.mxu0 0.0
      %1123 = vmatprep.subr.mxu0 0.0
      %1124 = vmatpush1.msra.mxu0 0.0
      %1125 = vmatprep.subr.mxu0 0.0
      %1126 = vmatpush1.msra.mxu0 0.0
      %1127 = vmatprep.subr.mxu0 0.0
      %1128 = vmatpush1.msra.mxu0 0.0
      %1129 = vmatprep.subr.mxu0 0.0
      %1130 = vmatpush1.msra.mxu0 0.0
      %1131 = vmatprep.subr.mxu0 0.0
      %1132 = vmatpush1.msra.mxu0 0.0
      %1133 = vmatprep.subr.mxu0 0.0
      %1134 = vmatpush1.msra.mxu0 0.0
      %1135 = vmatprep.subr.mxu0 0.0
      %1136 = vmatpush1.msra.mxu0 0.0
      %1137 = vmatprep.subr.mxu0 0.0
      %1138 = vmatpush1.msra.mxu0 0.0
      %1139 = vmatprep.subr.mxu0 0.0
      %1140 = vmatpush1.msra.mxu0 0.0
      %1141 = vmatprep.subr.mxu0 0.0
      %1142 = vmatpush1.msra.mxu0 0.0
      %1143 = vmatprep.subr.mxu0 0.0
      %1144 = vmatpush1.msra.mxu0 0.0
      %1145 = vmatprep.subr.mxu0 0.0
      %1146 = vmatpush1.msra.mxu0 0.0
      %1147 = vmatprep.subr.mxu0 0.0
      %1148 = vmatpush1.msra.mxu0 0.0
      %1149 = vmatprep.subr.mxu0 0.0
      %1150 = vmatpush1.msra.mxu0 0.0
      %1151 = vmatprep.subr.mxu0 0.0
      %1152 = vmatpush1.msra.mxu0 0.0
      %1153 = vmatprep.subr.mxu0 0.0
      %1154 = vmatpush1.msra.mxu0 0.0
      %1155 = vmatprep.subr.mxu0 0.0
      %1156 = vmatpush1.msra.mxu0 0.0
      %1157 = vmatprep.subr.mxu0 0.0
      %1158 = vmatpush1.msra.mxu0 0.0
      %1159 = vmatprep.subr.mxu0 0.0
      %1160 = vmatpush1.msra.mxu0 0.0
      %1161 = vmatprep.subr.mxu0 0.0
      %1162 = vmatpush1.msra.mxu0 0.0
      %1163 = vmatprep.subr.mxu0 0.0
      %1164 = vmatpush1.msra.mxu0 0.0
      %1165 = vmatprep.subr.mxu0 0.0
      %1166 = vmatpush1.msra.mxu0 0.0
      %1167 = vmatprep.subr.mxu0 0.0
      %1168 = vmatpush1.msra.mxu0 0.0
      %1169 = vmatprep.subr.mxu0 0.0
      %1170 = vmatpush1.msra.mxu0 0.0
      %1171 = vmatprep.subr.mxu0 0.0
      %1172 = vmatpush1.msra.mxu0 0.0
      %1173 = vmatprep.subr.mxu0 0.0
      %1174 = vmatpush1.msra.mxu0 0.0
      %1175 = vmatprep.subr.mxu0 0.0
      %1176 = vmatpush1.msra.mxu0 0.0
      %1177 = vmatprep.mubr.f32.mxu0 0.0
      %1178 = vmatmul.mubr.f32.gmra.mrb[0].mxu0 %v1108
      %v1179 = vpop.f32.mrb[0].mxu0
      %v1180 = vadd.f32 0.0, %v1179
      %v1181 = vpop.f32.mrb[0].mxu0
      %1182 = vmatprep.mubr.f32.mxu0 0.0
      %1183 = vmatmul.mubr.f32.gmra.mrb[0].mxu0 %v1111
      %v1184 = vpop.f32.mrb[0].mxu0
      %v1185 = vadd.f32 0.0, %v1184
      %v1186 = vpop.f32.mrb[0].mxu0
      %1187 = vdwg.mxu0
      %v1188 = vld [vmem:[%s483] sm:$0xff]
      %v1189 = vld [vmem:[%s483 + $0x8] sm:$0xff]
      %v1190 = vld [vmem:[%s8] sm:$0xff]
      %v1191 = vld [vmem:[%s8 + $0x8] sm:$0xff]
      %v1192 = vld [vmem:[%s8 + $0x10] sm:$0xff]
      %v1193 = vld [vmem:[%s8 + $0x18] sm:$0xff]
      %v1194 = vld [vmem:[%s8 + $0x20] sm:$0xff]
      %v1195 = vld [vmem:[%s8 + $0x28] sm:$0xff]
      %v1196 = vld [vmem:[%s8 + $0x30] sm:$0xff]
      %v1197 = vld [vmem:[%s8 + $0x38] sm:$0xff]
      %s1198 = scalar_lea.vmem %s10, 1
      %v1199 = vld [vmem:[%s1198] sm:$0x1]
      %vm1200 = vcmask 130048
      %v1202 = vsel %vm1200, %v1188, 0
      %v1205 = vsel %vm1200, %v1189, 0
      %1207 = vmatprep.subr.mxu0 0.0
      %1208 = vmatpush1.msra.mxu0 %v1180
      %1209 = vmatprep.subr.mxu0 0.0
      %1210 = vmatpush1.msra.mxu0 %v1185
      %1211 = vmatprep.subr.mxu0 0.0
      %1212 = vmatpush1.msra.mxu0 0.0
      %1213 = vmatprep.subr.mxu0 0.0
      %1214 = vmatpush1.msra.mxu0 0.0
      %1215 = vmatprep.subr.mxu0 0.0
      %1216 = vmatpush1.msra.mxu0 0.0
      %1217 = vmatprep.subr.mxu0 0.0
      %1218 = vmatpush1.msra.mxu0 0.0
      %1219 = vmatprep.subr.mxu0 0.0
      %1220 = vmatpush1.msra.mxu0 0.0
      %1221 = vmatprep.subr.mxu0 0.0
      %1222 = vmatpush1.msra.mxu0 0.0
      %1223 = vmatprep.subr.mxu0 0.0
      %1224 = vmatpush1.msra.mxu0 0.0
      %1225 = vmatprep.subr.mxu0 0.0
      %1226 = vmatpush1.msra.mxu0 0.0
      %1227 = vmatprep.subr.mxu0 0.0
      %1228 = vmatpush1.msra.mxu0 0.0
      %1229 = vmatprep.subr.mxu0 0.0
      %1230 = vmatpush1.msra.mxu0 0.0
      %1231 = vmatprep.subr.mxu0 0.0
      %1232 = vmatpush1.msra.mxu0 0.0
      %1233 = vmatprep.subr.mxu0 0.0
      %1234 = vmatpush1.msra.mxu0 0.0
      %1235 = vmatprep.subr.mxu0 0.0
      %1236 = vmatpush1.msra.mxu0 0.0
      %1237 = vmatprep.subr.mxu0 0.0
      %1238 = vmatpush1.msra.mxu0 0.0
      %1239 = vmatprep.subr.mxu0 0.0
      %1240 = vmatpush1.msra.mxu0 0.0
      %1241 = vmatprep.subr.mxu0 0.0
      %1242 = vmatpush1.msra.mxu0 0.0
      %1243 = vmatprep.subr.mxu0 0.0
      %1244 = vmatpush1.msra.mxu0 0.0
      %1245 = vmatprep.subr.mxu0 0.0
      %1246 = vmatpush1.msra.mxu0 0.0
      %1247 = vmatprep.subr.mxu0 0.0
      %1248 = vmatpush1.msra.mxu0 0.0
      %1249 = vmatprep.subr.mxu0 0.0
      %1250 = vmatpush1.msra.mxu0 0.0
      %1251 = vmatprep.subr.mxu0 0.0
      %1252 = vmatpush1.msra.mxu0 0.0
      %1253 = vmatprep.subr.mxu0 0.0
      %1254 = vmatpush1.msra.mxu0 0.0
      %1255 = vmatprep.subr.mxu0 0.0
      %1256 = vmatpush1.msra.mxu0 0.0
      %1257 = vmatprep.subr.mxu0 0.0
      %1258 = vmatpush1.msra.mxu0 0.0
      %1259 = vmatprep.subr.mxu0 0.0
      %1260 = vmatpush1.msra.mxu0 0.0
      %1261 = vmatprep.subr.mxu0 0.0
      %1262 = vmatpush1.msra.mxu0 0.0
      %1263 = vmatprep.subr.mxu0 0.0
      %1264 = vmatpush1.msra.mxu0 0.0
      %1265 = vmatprep.subr.mxu0 0.0
      %1266 = vmatpush1.msra.mxu0 0.0
      %1267 = vmatprep.subr.mxu0 0.0
      %1268 = vmatpush1.msra.mxu0 0.0
      %1269 = vmatprep.subr.mxu0 0.0
      %1270 = vmatpush1.msra.mxu0 0.0
      %1271 = vmatprep.mubr.f32.mxu0 0.0
      %1272 = vmatmul.mubr.f32.gmra.mrb[0].mxu0 %v1202
      %v1273 = vpop.f32.mrb[0].mxu0
      %v1274 = vadd.f32 0.0, %v1273
      %v1275 = vpop.f32.mrb[0].mxu0
      %1276 = vmatprep.mubr.f32.mxu0 0.0
      %1277 = vmatmul.mubr.f32.gmra.mrb[0].mxu0 %v1205
      %v1278 = vpop.f32.mrb[0].mxu0
      %v1279 = vadd.f32 0.0, %v1278
      %v1280 = vpop.f32.mrb[0].mxu0
      %1281 = vdwg.mxu0
      %1284 = vrot.lane.b32.xlu0 %v1180, 32
      %v1285 = vpop.permute.xlu0 %1284
      %1286 = vrot.lane.b32.xlu0 %v1185, 32
      %v1287 = vpop.permute.xlu0 %1286
      %v1290 = vsel %vm621, %v1274, %v1285
      %v1291 = vsel %vm621, %v1279, %v1287
      %v1293 = vlaneseq
      %v1294 = vshrl.u32 %v1293, 7
      %v1295 = vsub.s32 0, %v1294
      %v1296 = vrot.slane %v1199, %v1295
      %vm1298 = vcmask 523264
      %v1300 = vsel %vm1298, %v1290, 0
      %v1303 = vsel %vm1298, %v1291, 0
      %1305 = vmatprep.subr.mxu0 0.0
      %1306 = vmatpush1.msra.mxu0 %v1190
      %1307 = vmatprep.subr.mxu0 0.0
      %1308 = vmatpush1.msra.mxu0 %v1191
      %1309 = vmatprep.subr.mxu0 0.0
      %1310 = vmatpush1.msra.mxu0 %v1192
      %1311 = vmatprep.subr.mxu0 0.0
      %1312 = vmatpush1.msra.mxu0 %v1193
      %1313 = vmatprep.subr.mxu0 0.0
      %1314 = vmatpush1.msra.mxu0 %v1194
      %1315 = vmatprep.subr.mxu0 0.0
      %1316 = vmatpush1.msra.mxu0 %v1195
      %1317 = vmatprep.subr.mxu0 0.0
      %1318 = vmatpush1.msra.mxu0 %v1196
      %1319 = vmatprep.subr.mxu0 0.0
      %1320 = vmatpush1.msra.mxu0 %v1197
      %1321 = vmatprep.subr.mxu0 0.0
      %1322 = vmatpush1.msra.mxu0 0.0
      %1323 = vmatprep.subr.mxu0 0.0
      %1324 = vmatpush1.msra.mxu0 0.0
      %1325 = vmatprep.subr.mxu0 0.0
      %1326 = vmatpush1.msra.mxu0 0.0
      %1327 = vmatprep.subr.mxu0 0.0
      %1328 = vmatpush1.msra.mxu0 0.0
      %1329 = vmatprep.subr.mxu0 0.0
      %1330 = vmatpush1.msra.mxu0 0.0
      %1331 = vmatprep.subr.mxu0 0.0
      %1332 = vmatpush1.msra.mxu0 0.0
      %1333 = vmatprep.subr.mxu0 0.0
      %1334 = vmatpush1.msra.mxu0 0.0
      %1335 = vmatprep.subr.mxu0 0.0
      %1336 = vmatpush1.msra.mxu0 0.0
      %1337 = vmatprep.subr.mxu0 0.0
      %1338 = vmatpush1.msra.mxu0 0.0
      %1339 = vmatprep.subr.mxu0 0.0
      %1340 = vmatpush1.msra.mxu0 0.0
      %1341 = vmatprep.subr.mxu0 0.0
      %1342 = vmatpush1.msra.mxu0 0.0
      %1343 = vmatprep.subr.mxu0 0.0
      %1344 = vmatpush1.msra.mxu0 0.0
      %1345 = vmatprep.subr.mxu0 0.0
      %1346 = vmatpush1.msra.mxu0 0.0
      %1347 = vmatprep.subr.mxu0 0.0
      %1348 = vmatpush1.msra.mxu0 0.0
      %1349 = vmatprep.subr.mxu0 0.0
      %1350 = vmatpush1.msra.mxu0 0.0
      %1351 = vmatprep.subr.mxu0 0.0
      %1352 = vmatpush1.msra.mxu0 0.0
      %1353 = vmatprep.subr.mxu0 0.0
      %1354 = vmatpush1.msra.mxu0 0.0
      %1355 = vmatprep.subr.mxu0 0.0
      %1356 = vmatpush1.msra.mxu0 0.0
      %1357 = vmatprep.subr.mxu0 0.0
      %1358 = vmatpush1.msra.mxu0 0.0
      %1359 = vmatprep.subr.mxu0 0.0
      %1360 = vmatpush1.msra.mxu0 0.0
      %1361 = vmatprep.subr.mxu0 0.0
      %1362 = vmatpush1.msra.mxu0 0.0
      %1363 = vmatprep.subr.mxu0 0.0
      %1364 = vmatpush1.msra.mxu0 0.0
      %1365 = vmatprep.subr.mxu0 0.0
      %1366 = vmatpush1.msra.mxu0 0.0
      %1367 = vmatprep.subr.mxu0 0.0
      %1368 = vmatpush1.msra.mxu0 0.0
      %1369 = vmatprep.mubr.f32.mxu0 0.0
      %1370 = vmatmul.mubr.f32.gmra.mrb[0].mxu0 %v1300
      %v1371 = vpop.f32.mrb[0].mxu0
      %v1372 = vadd.f32 %v1296, %v1371
      %v1373 = vpop.f32.mrb[0].mxu0
      %1374 = vmatprep.mubr.f32.mxu0 0.0
      %1375 = vmatmul.mubr.f32.gmra.mrb[0].mxu0 %v1303
      %v1376 = vpop.f32.mrb[0].mxu0
      %v1377 = vadd.f32 %v1296, %v1376
      %v1378 = vpop.f32.mrb[0].mxu0
      %1379 = vdwg.mxu0
      %v1380 = vmax.f32 %v1372, 0.0
      %v1381 = vmax.f32 %v1377, 0.0
      %s1382 = scalar_lea.vmem %s8, 64
      %v1383 = vld [vmem:[%s1382] sm:$0xff]
      %v1384 = vld [vmem:[%s1382 + $0x8] sm:$0xff]
      %v1385 = vld [vmem:[%s1382 + $0x10] sm:$0xff]
      %v1386 = vld [vmem:[%s1382 + $0x18] sm:$0xff]
      %v1387 = vld [vmem:[%s1382 + $0x20] sm:$0xff]
      %v1388 = vld [vmem:[%s1382 + $0x28] sm:$0xff]
      %v1389 = vld [vmem:[%s1382 + $0x30] sm:$0xff]
      %v1390 = vld [vmem:[%s1382 + $0x38] sm:$0xff]
      %s1391 = scalar_lea.vmem %s10, 2
      %v1392 = vld [vmem:[%s1391] sm:$0x1]
      %1393 = vmatprep.subr.mxu0 0.0
      %1394 = vmatpush1.msra.mxu0 %v1380
      %1395 = vmatprep.subr.mxu0 0.0
      %1396 = vmatpush1.msra.mxu0 %v1381
      %1397 = vmatprep.subr.mxu0 0.0
      %1398 = vmatpush1.msra.mxu0 0.0
      %1399 = vmatprep.subr.mxu0 0.0
      %1400 = vmatpush1.msra.mxu0 0.0
      %1401 = vmatprep.subr.mxu0 0.0
      %1402 = vmatpush1.msra.mxu0 0.0
      %1403 = vmatprep.subr.mxu0 0.0
      %1404 = vmatpush1.msra.mxu0 0.0
      %1405 = vmatprep.subr.mxu0 0.0
      %1406 = vmatpush1.msra.mxu0 0.0
      %1407 = vmatprep.subr.mxu0 0.0
      %1408 = vmatpush1.msra.mxu0 0.0
      %1409 = vmatprep.subr.mxu0 0.0
      %1410 = vmatpush1.msra.mxu0 0.0
      %1411 = vmatprep.subr.mxu0 0.0
      %1412 = vmatpush1.msra.mxu0 0.0
      %1413 = vmatprep.subr.mxu0 0.0
      %1414 = vmatpush1.msra.mxu0 0.0
      %1415 = vmatprep.subr.mxu0 0.0
      %1416 = vmatpush1.msra.mxu0 0.0
      %1417 = vmatprep.subr.mxu0 0.0
      %1418 = vmatpush1.msra.mxu0 0.0
      %1419 = vmatprep.subr.mxu0 0.0
      %1420 = vmatpush1.msra.mxu0 0.0
      %1421 = vmatprep.subr.mxu0 0.0
      %1422 = vmatpush1.msra.mxu0 0.0
      %1423 = vmatprep.subr.mxu0 0.0
      %1424 = vmatpush1.msra.mxu0 0.0
      %1425 = vmatprep.subr.mxu0 0.0
      %1426 = vmatpush1.msra.mxu0 0.0
      %1427 = vmatprep.subr.mxu0 0.0
      %1428 = vmatpush1.msra.mxu0 0.0
      %1429 = vmatprep.subr.mxu0 0.0
      %1430 = vmatpush1.msra.mxu0 0.0
      %1431 = vmatprep.subr.mxu0 0.0
      %1432 = vmatpush1.msra.mxu0 0.0
      %1433 = vmatprep.subr.mxu0 0.0
      %1434 = vmatpush1.msra.mxu0 0.0
      %1435 = vmatprep.subr.mxu0 0.0
      %1436 = vmatpush1.msra.mxu0 0.0
      %1437 = vmatprep.subr.mxu0 0.0
      %1438 = vmatpush1.msra.mxu0 0.0
      %1439 = vmatprep.subr.mxu0 0.0
      %1440 = vmatpush1.msra.mxu0 0.0
      %1441 = vmatprep.subr.mxu0 0.0
      %1442 = vmatpush1.msra.mxu0 0.0
      %1443 = vmatprep.subr.mxu0 0.0
      %1444 = vmatpush1.msra.mxu0 0.0
      %1445 = vmatprep.subr.mxu0 0.0
      %1446 = vmatpush1.msra.mxu0 0.0
      %1447 = vmatprep.subr.mxu0 0.0
      %1448 = vmatpush1.msra.mxu0 0.0
      %1449 = vmatprep.subr.mxu0 0.0
      %1450 = vmatpush1.msra.mxu0 0.0
      %1451 = vmatprep.subr.mxu0 0.0
      %1452 = vmatpush1.msra.mxu0 0.0
      %1453 = vmatprep.subr.mxu0 0.0
      %1454 = vmatpush1.msra.mxu0 0.0
      %1455 = vmatprep.subr.mxu0 0.0
      %1456 = vmatpush1.msra.mxu0 0.0
      %1457 = vmatprep.mubr.f32.mxu0 0.0
      %1458 = vmatmul.mubr.f32.gmra.mrb[0].mxu0 %v1202
      %v1459 = vpop.f32.mrb[0].mxu0
      %v1460 = vadd.f32 0.0, %v1459
      %v1461 = vpop.f32.mrb[0].mxu0
      %1462 = vmatprep.mubr.f32.mxu0 0.0
      %1463 = vmatmul.mubr.f32.gmra.mrb[0].mxu0 %v1205
      %v1464 = vpop.f32.mrb[0].mxu0
      %v1465 = vadd.f32 0.0, %v1464
      %v1466 = vpop.f32.mrb[0].mxu0
      %1467 = vdwg.mxu0
      %1470 = vrot.lane.b32.xlu0 %v1380, 32
      %v1471 = vpop.permute.xlu0 %1470
      %1472 = vrot.lane.b32.xlu0 %v1381, 32
      %v1473 = vpop.permute.xlu0 %1472
      %v1476 = vsel %vm621, %v1460, %v1471
      %v1477 = vsel %vm621, %v1465, %v1473
      %v1479 = vlaneseq
      %v1480 = vshrl.u32 %v1479, 7
      %v1481 = vsub.s32 0, %v1480
      %v1482 = vrot.slane %v1392, %v1481
      %v1485 = vsel %vm1298, %v1476, 0
      %v1488 = vsel %vm1298, %v1477, 0
      %1490 = vmatprep.subr.mxu0 0.0
      %1491 = vmatpush1.msra.mxu0 %v1383
      %1492 = vmatprep.subr.mxu0 0.0
      %1493 = vmatpush1.msra.mxu0 %v1384
      %1494 = vmatprep.subr.mxu0 0.0
      %1495 = vmatpush1.msra.mxu0 %v1385
      %1496 = vmatprep.subr.mxu0 0.0
      %1497 = vmatpush1.msra.mxu0 %v1386
      %1498 = vmatprep.subr.mxu0 0.0
      %1499 = vmatpush1.msra.mxu0 %v1387
      %1500 = vmatprep.subr.mxu0 0.0
      %1501 = vmatpush1.msra.mxu0 %v1388
      %1502 = vmatprep.subr.mxu0 0.0
      %1503 = vmatpush1.msra.mxu0 %v1389
      %1504 = vmatprep.subr.mxu0 0.0
      %1505 = vmatpush1.msra.mxu0 %v1390
      %1506 = vmatprep.subr.mxu0 0.0
      %1507 = vmatpush1.msra.mxu0 0.0
      %1508 = vmatprep.subr.mxu0 0.0
      %1509 = vmatpush1.msra.mxu0 0.0
      %1510 = vmatprep.subr.mxu0 0.0
      %1511 = vmatpush1.msra.mxu0 0.0
      %1512 = vmatprep.subr.mxu0 0.0
      %1513 = vmatpush1.msra.mxu0 0.0
      %1514 = vmatprep.subr.mxu0 0.0
      %1515 = vmatpush1.msra.mxu0 0.0
      %1516 = vmatprep.subr.mxu0 0.0
      %1517 = vmatpush1.msra.mxu0 0.0
      %1518 = vmatprep.subr.mxu0 0.0
      %1519 = vmatpush1.msra.mxu0 0.0
      %1520 = vmatprep.subr.mxu0 0.0
      %1521 = vmatpush1.msra.mxu0 0.0
      %1522 = vmatprep.subr.mxu0 0.0
      %1523 = vmatpush1.msra.mxu0 0.0
      %1524 = vmatprep.subr.mxu0 0.0
      %1525 = vmatpush1.msra.mxu0 0.0
      %1526 = vmatprep.subr.mxu0 0.0
      %1527 = vmatpush1.msra.mxu0 0.0
      %1528 = vmatprep.subr.mxu0 0.0
      %1529 = vmatpush1.msra.mxu0 0.0
      %1530 = vmatprep.subr.mxu0 0.0
      %1531 = vmatpush1.msra.mxu0 0.0
      %1532 = vmatprep.subr.mxu0 0.0
      %1533 = vmatpush1.msra.mxu0 0.0
      %1534 = vmatprep.subr.mxu0 0.0
      %1535 = vmatpush1.msra.mxu0 0.0
      %1536 = vmatprep.subr.mxu0 0.0
      %1537 = vmatpush1.msra.mxu0 0.0
      %1538 = vmatprep.subr.mxu0 0.0
      %1539 = vmatpush1.msra.mxu0 0.0
      %1540 = vmatprep.subr.mxu0 0.0
      %1541 = vmatpush1.msra.mxu0 0.0
      %1542 = vmatprep.subr.mxu0 0.0
      %1543 = vmatpush1.msra.mxu0 0.0
      %1544 = vmatprep.subr.mxu0 0.0
      %1545 = vmatpush1.msra.mxu0 0.0
      %1546 = vmatprep.subr.mxu0 0.0
      %1547 = vmatpush1.msra.mxu0 0.0
      %1548 = vmatprep.subr.mxu0 0.0
      %1549 = vmatpush1.msra.mxu0 0.0
      %1550 = vmatprep.subr.mxu0 0.0
      %1551 = vmatpush1.msra.mxu0 0.0
      %1552 = vmatprep.subr.mxu0 0.0
      %1553 = vmatpush1.msra.mxu0 0.0
      %1554 = vmatprep.mubr.f32.mxu0 0.0
      %1555 = vmatmul.mubr.f32.gmra.mrb[0].mxu0 %v1485
      %v1556 = vpop.f32.mrb[0].mxu0
      %v1557 = vadd.f32 %v1482, %v1556
      %v1558 = vpop.f32.mrb[0].mxu0
      %1559 = vmatprep.mubr.f32.mxu0 0.0
      %1560 = vmatmul.mubr.f32.gmra.mrb[0].mxu0 %v1488
      %v1561 = vpop.f32.mrb[0].mxu0
      %v1562 = vadd.f32 %v1482, %v1561
      %v1563 = vpop.f32.mrb[0].mxu0
      %1564 = vdwg.mxu0
      %v1565 = vld [vmem:[%s468] sm:$0xff]
      %v1566 = vld [vmem:[%s468 + $0x8] sm:$0xff]
      %v1567 = vld [vmem:[%s9] sm:$0xff]
      %v1568 = vld [vmem:[%s9 + $0x8] sm:$0xff]
      %v1569 = vld [vmem:[%s9 + $0x10] sm:$0xff]
      %v1570 = vld [vmem:[%s9 + $0x18] sm:$0xff]
      %s1571 = scalar_lea.vmem %s10, 3
      %v1572 = vld [vmem:[%s1571] sm:$0x1]
      %1573 = vmatprep.subr.mxu0 0.0
      %1574 = vmatpush1.msra.mxu0 %v1565
      %1575 = vmatprep.subr.mxu0 0.0
      %1576 = vmatpush1.msra.mxu0 %v1566
      %1577 = vmatprep.subr.mxu0 0.0
      %1578 = vmatpush1.msra.mxu0 0.0
      %1579 = vmatprep.subr.mxu0 0.0
      %1580 = vmatpush1.msra.mxu0 0.0
      %1581 = vmatprep.subr.mxu0 0.0
      %1582 = vmatpush1.msra.mxu0 0.0
      %1583 = vmatprep.subr.mxu0 0.0
      %1584 = vmatpush1.msra.mxu0 0.0
      %1585 = vmatprep.subr.mxu0 0.0
      %1586 = vmatpush1.msra.mxu0 0.0
      %1587 = vmatprep.subr.mxu0 0.0
      %1588 = vmatpush1.msra.mxu0 0.0
      %1589 = vmatprep.subr.mxu0 0.0
      %1590 = vmatpush1.msra.mxu0 0.0
      %1591 = vmatprep.subr.mxu0 0.0
      %1592 = vmatpush1.msra.mxu0 0.0
      %1593 = vmatprep.subr.mxu0 0.0
      %1594 = vmatpush1.msra.mxu0 0.0
      %1595 = vmatprep.subr.mxu0 0.0
      %1596 = vmatpush1.msra.mxu0 0.0
      %1597 = vmatprep.subr.mxu0 0.0
      %1598 = vmatpush1.msra.mxu0 0.0
      %1599 = vmatprep.subr.mxu0 0.0
      %1600 = vmatpush1.msra.mxu0 0.0
      %1601 = vmatprep.subr.mxu0 0.0
      %1602 = vmatpush1.msra.mxu0 0.0
      %1603 = vmatprep.subr.mxu0 0.0
      %1604 = vmatpush1.msra.mxu0 0.0
      %1605 = vmatprep.subr.mxu0 0.0
      %1606 = vmatpush1.msra.mxu0 0.0
      %1607 = vmatprep.subr.mxu0 0.0
      %1608 = vmatpush1.msra.mxu0 0.0
      %1609 = vmatprep.subr.mxu0 0.0
      %1610 = vmatpush1.msra.mxu0 0.0
      %1611 = vmatprep.subr.mxu0 0.0
      %1612 = vmatpush1.msra.mxu0 0.0
      %1613 = vmatprep.subr.mxu0 0.0
      %1614 = vmatpush1.msra.mxu0 0.0
      %1615 = vmatprep.subr.mxu0 0.0
      %1616 = vmatpush1.msra.mxu0 0.0
      %1617 = vmatprep.subr.mxu0 0.0
      %1618 = vmatpush1.msra.mxu0 0.0
      %1619 = vmatprep.subr.mxu0 0.0
      %1620 = vmatpush1.msra.mxu0 0.0
      %1621 = vmatprep.subr.mxu0 0.0
      %1622 = vmatpush1.msra.mxu0 0.0
      %1623 = vmatprep.subr.mxu0 0.0
      %1624 = vmatpush1.msra.mxu0 0.0
      %1625 = vmatprep.subr.mxu0 0.0
      %1626 = vmatpush1.msra.mxu0 0.0
      %1627 = vmatprep.subr.mxu0 0.0
      %1628 = vmatpush1.msra.mxu0 0.0
      %1629 = vmatprep.subr.mxu0 0.0
      %1630 = vmatpush1.msra.mxu0 0.0
      %1631 = vmatprep.subr.mxu0 0.0
      %1632 = vmatpush1.msra.mxu0 0.0
      %1633 = vmatprep.subr.mxu0 0.0
      %1634 = vmatpush1.msra.mxu0 0.0
      %1635 = vmatprep.subr.mxu0 0.0
      %1636 = vmatpush1.msra.mxu0 0.0
      %1637 = vmatprep.mubr.f32.mxu0 0.0
      %1638 = vmatmul.mubr.f32.gmra.mrb[0].mxu0 %v1202
      %v1639 = vpop.f32.mrb[0].mxu0
      %v1640 = vadd.f32 0.0, %v1639
      %v1641 = vpop.f32.mrb[0].mxu0
      %1642 = vmatprep.mubr.f32.mxu0 0.0
      %1643 = vmatmul.mubr.f32.gmra.mrb[0].mxu0 %v1205
      %v1644 = vpop.f32.mrb[0].mxu0
      %v1645 = vadd.f32 0.0, %v1644
      %v1646 = vpop.f32.mrb[0].mxu0
      %1647 = vdwg.mxu0
      %1650 = vrot.lane.b32.xlu0 %v1565, 16
      %v1651 = vpop.permute.xlu0 %1650
      %1652 = vrot.lane.b32.xlu0 %v1566, 16
      %v1653 = vpop.permute.xlu0 %1652
      %v1656 = vsel %vm1200, %v1640, %v1651
      %v1657 = vsel %vm1200, %v1645, %v1653
      %v1659 = vlaneseq
      %v1660 = vshrl.u32 %v1659, 7
      %v1661 = vsub.s32 0, %v1660
      %v1662 = vrot.slane %v1572, %v1661
      %v1665 = vsel %vm621, %v1656, 0
      %v1668 = vsel %vm621, %v1657, 0
      %1670 = vmatprep.subr.mxu0 0.0
      %1671 = vmatpush1.msra.mxu0 %v1567
      %1672 = vmatprep.subr.mxu0 0.0
      %1673 = vmatpush1.msra.mxu0 %v1568
      %1674 = vmatprep.subr.mxu0 0.0
      %1675 = vmatpush1.msra.mxu0 %v1569
      %1676 = vmatprep.subr.mxu0 0.0
      %1677 = vmatpush1.msra.mxu0 %v1570
      %1678 = vmatprep.subr.mxu0 0.0
      %1679 = vmatpush1.msra.mxu0 0.0
      %1680 = vmatprep.subr.mxu0 0.0
      %1681 = vmatpush1.msra.mxu0 0.0
      %1682 = vmatprep.subr.mxu0 0.0
      %1683 = vmatpush1.msra.mxu0 0.0
      %1684 = vmatprep.subr.mxu0 0.0
      %1685 = vmatpush1.msra.mxu0 0.0
      %1686 = vmatprep.subr.mxu0 0.0
      %1687 = vmatpush1.msra.mxu0 0.0
      %1688 = vmatprep.subr.mxu0 0.0
      %1689 = vmatpush1.msra.mxu0 0.0
      %1690 = vmatprep.subr.mxu0 0.0
      %1691 = vmatpush1.msra.mxu0 0.0
      %1692 = vmatprep.subr.mxu0 0.0
      %1693 = vmatpush1.msra.mxu0 0.0
      %1694 = vmatprep.subr.mxu0 0.0
      %1695 = vmatpush1.msra.mxu0 0.0
      %1696 = vmatprep.subr.mxu0 0.0
      %1697 = vmatpush1.msra.mxu0 0.0
      %1698 = vmatprep.subr.mxu0 0.0
      %1699 = vmatpush1.msra.mxu0 0.0
      %1700 = vmatprep.subr.mxu0 0.0
      %1701 = vmatpush1.msra.mxu0 0.0
      %1702 = vmatprep.subr.mxu0 0.0
      %1703 = vmatpush1.msra.mxu0 0.0
      %1704 = vmatprep.subr.mxu0 0.0
      %1705 = vmatpush1.msra.mxu0 0.0
      %1706 = vmatprep.subr.mxu0 0.0
      %1707 = vmatpush1.msra.mxu0 0.0
      %1708 = vmatprep.subr.mxu0 0.0
      %1709 = vmatpush1.msra.mxu0 0.0
      %1710 = vmatprep.subr.mxu0 0.0
      %1711 = vmatpush1.msra.mxu0 0.0
      %1712 = vmatprep.subr.mxu0 0.0
      %1713 = vmatpush1.msra.mxu0 0.0
      %1714 = vmatprep.subr.mxu0 0.0
      %1715 = vmatpush1.msra.mxu0 0.0
      %1716 = vmatprep.subr.mxu0 0.0
      %1717 = vmatpush1.msra.mxu0 0.0
      %1718 = vmatprep.subr.mxu0 0.0
      %1719 = vmatpush1.msra.mxu0 0.0
      %1720 = vmatprep.subr.mxu0 0.0
      %1721 = vmatpush1.msra.mxu0 0.0
      %1722 = vmatprep.subr.mxu0 0.0
      %1723 = vmatpush1.msra.mxu0 0.0
      %1724 = vmatprep.subr.mxu0 0.0
      %1725 = vmatpush1.msra.mxu0 0.0
      %1726 = vmatprep.subr.mxu0 0.0
      %1727 = vmatpush1.msra.mxu0 0.0
      %1728 = vmatprep.subr.mxu0 0.0
      %1729 = vmatpush1.msra.mxu0 0.0
      %1730 = vmatprep.subr.mxu0 0.0
      %1731 = vmatpush1.msra.mxu0 0.0
      %1732 = vmatprep.subr.mxu0 0.0
      %1733 = vmatpush1.msra.mxu0 0.0
      %1734 = vmatprep.mubr.f32.mxu0 0.0
      %1735 = vmatmul.mubr.f32.gmra.mrb[0].mxu0 %v1665
      %v1736 = vpop.f32.mrb[0].mxu0
      %v1737 = vadd.f32 %v1662, %v1736
      %v1738 = vpop.f32.mrb[0].mxu0
      %1739 = vmatprep.mubr.f32.mxu0 0.0
      %1740 = vmatmul.mubr.f32.gmra.mrb[0].mxu0 %v1668
      %v1741 = vpop.f32.mrb[0].mxu0
      %v1742 = vadd.f32 %v1662, %v1741
      %v1743 = vpop.f32.mrb[0].mxu0
      %1744 = vdwg.mxu0
      %v1745 = vmax.f32 %v1737, 0.0
      %v1746 = vmax.f32 %v1742, 0.0
      %s1747 = scalar_lea.vmem %s8, 128
      %v1748 = vld [vmem:[%s1747] sm:$0xff]
      %v1749 = vld [vmem:[%s1747 + $0x8] sm:$0xff]
      %v1750 = vld [vmem:[%s1747 + $0x10] sm:$0xff]
      %v1751 = vld [vmem:[%s1747 + $0x18] sm:$0xff]
      %v1752 = vld [vmem:[%s1747 + $0x20] sm:$0xff]
      %v1753 = vld [vmem:[%s1747 + $0x28] sm:$0xff]
      %v1754 = vld [vmem:[%s1747 + $0x30] sm:$0xff]
      %v1755 = vld [vmem:[%s1747 + $0x38] sm:$0xff]
      %s1756 = scalar_lea.vmem %s10, 4
      %v1757 = vld [vmem:[%s1756] sm:$0x1]
      %1758 = vmatprep.subr.mxu0 0.0
      %1759 = vmatpush1.msra.mxu0 %v1745
      %1760 = vmatprep.subr.mxu0 0.0
      %1761 = vmatpush1.msra.mxu0 %v1746
      %1762 = vmatprep.subr.mxu0 0.0
      %1763 = vmatpush1.msra.mxu0 0.0
      %1764 = vmatprep.subr.mxu0 0.0
      %1765 = vmatpush1.msra.mxu0 0.0
      %1766 = vmatprep.subr.mxu0 0.0
      %1767 = vmatpush1.msra.mxu0 0.0
      %1768 = vmatprep.subr.mxu0 0.0
      %1769 = vmatpush1.msra.mxu0 0.0
      %1770 = vmatprep.subr.mxu0 0.0
      %1771 = vmatpush1.msra.mxu0 0.0
      %1772 = vmatprep.subr.mxu0 0.0
      %1773 = vmatpush1.msra.mxu0 0.0
      %1774 = vmatprep.subr.mxu0 0.0
      %1775 = vmatpush1.msra.mxu0 0.0
      %1776 = vmatprep.subr.mxu0 0.0
      %1777 = vmatpush1.msra.mxu0 0.0
      %1778 = vmatprep.subr.mxu0 0.0
      %1779 = vmatpush1.msra.mxu0 0.0
      %1780 = vmatprep.subr.mxu0 0.0
      %1781 = vmatpush1.msra.mxu0 0.0
      %1782 = vmatprep.subr.mxu0 0.0
      %1783 = vmatpush1.msra.mxu0 0.0
      %1784 = vmatprep.subr.mxu0 0.0
      %1785 = vmatpush1.msra.mxu0 0.0
      %1786 = vmatprep.subr.mxu0 0.0
      %1787 = vmatpush1.msra.mxu0 0.0
      %1788 = vmatprep.subr.mxu0 0.0
      %1789 = vmatpush1.msra.mxu0 0.0
      %1790 = vmatprep.subr.mxu0 0.0
      %1791 = vmatpush1.msra.mxu0 0.0
      %1792 = vmatprep.subr.mxu0 0.0
      %1793 = vmatpush1.msra.mxu0 0.0
      %1794 = vmatprep.subr.mxu0 0.0
      %1795 = vmatpush1.msra.mxu0 0.0
      %1796 = vmatprep.subr.mxu0 0.0
      %1797 = vmatpush1.msra.mxu0 0.0
      %1798 = vmatprep.subr.mxu0 0.0
      %1799 = vmatpush1.msra.mxu0 0.0
      %1800 = vmatprep.subr.mxu0 0.0
      %1801 = vmatpush1.msra.mxu0 0.0
      %1802 = vmatprep.subr.mxu0 0.0
      %1803 = vmatpush1.msra.mxu0 0.0
      %1804 = vmatprep.subr.mxu0 0.0
      %1805 = vmatpush1.msra.mxu0 0.0
      %1806 = vmatprep.subr.mxu0 0.0
      %1807 = vmatpush1.msra.mxu0 0.0
      %1808 = vmatprep.subr.mxu0 0.0
      %1809 = vmatpush1.msra.mxu0 0.0
      %1810 = vmatprep.subr.mxu0 0.0
      %1811 = vmatpush1.msra.mxu0 0.0
      %1812 = vmatprep.subr.mxu0 0.0
      %1813 = vmatpush1.msra.mxu0 0.0
      %1814 = vmatprep.subr.mxu0 0.0
      %1815 = vmatpush1.msra.mxu0 0.0
      %1816 = vmatprep.subr.mxu0 0.0
      %1817 = vmatpush1.msra.mxu0 0.0
      %1818 = vmatprep.subr.mxu0 0.0
      %1819 = vmatpush1.msra.mxu0 0.0
      %1820 = vmatprep.subr.mxu0 0.0
      %1821 = vmatpush1.msra.mxu0 0.0
      %1822 = vmatprep.mubr.f32.mxu0 0.0
      %1823 = vmatmul.mubr.f32.gmra.mrb[0].mxu0 %v1202
      %v1824 = vpop.f32.mrb[0].mxu0
      %v1825 = vadd.f32 0.0, %v1824
      %v1826 = vpop.f32.mrb[0].mxu0
      %1827 = vmatprep.mubr.f32.mxu0 0.0
      %1828 = vmatmul.mubr.f32.gmra.mrb[0].mxu0 %v1205
      %v1829 = vpop.f32.mrb[0].mxu0
      %v1830 = vadd.f32 0.0, %v1829
      %v1831 = vpop.f32.mrb[0].mxu0
      %1832 = vdwg.mxu0
      %1835 = vrot.lane.b32.xlu0 %v1745, 32
      %v1836 = vpop.permute.xlu0 %1835
      %1837 = vrot.lane.b32.xlu0 %v1746, 32
      %v1838 = vpop.permute.xlu0 %1837
      %v1841 = vsel %vm621, %v1825, %v1836
      %v1842 = vsel %vm621, %v1830, %v1838
      %v1844 = vlaneseq
      %v1845 = vshrl.u32 %v1844, 7
      %v1846 = vsub.s32 0, %v1845
      %v1847 = vrot.slane %v1757, %v1846
      %v1850 = vsel %vm1298, %v1841, 0
      %v1853 = vsel %vm1298, %v1842, 0
      %1855 = vmatprep.subr.mxu0 0.0
      %1856 = vmatpush1.msra.mxu0 %v1748
      %1857 = vmatprep.subr.mxu0 0.0
      %1858 = vmatpush1.msra.mxu0 %v1749
      %1859 = vmatprep.subr.mxu0 0.0
      %1860 = vmatpush1.msra.mxu0 %v1750
      %1861 = vmatprep.subr.mxu0 0.0
      %1862 = vmatpush1.msra.mxu0 %v1751
      %1863 = vmatprep.subr.mxu0 0.0
      %1864 = vmatpush1.msra.mxu0 %v1752
      %1865 = vmatprep.subr.mxu0 0.0
      %1866 = vmatpush1.msra.mxu0 %v1753
      %1867 = vmatprep.subr.mxu0 0.0
      %1868 = vmatpush1.msra.mxu0 %v1754
      %1869 = vmatprep.subr.mxu0 0.0
      %1870 = vmatpush1.msra.mxu0 %v1755
      %1871 = vmatprep.subr.mxu0 0.0
      %1872 = vmatpush1.msra.mxu0 0.0
      %1873 = vmatprep.subr.mxu0 0.0
      %1874 = vmatpush1.msra.mxu0 0.0
      %1875 = vmatprep.subr.mxu0 0.0
      %1876 = vmatpush1.msra.mxu0 0.0
      %1877 = vmatprep.subr.mxu0 0.0
      %1878 = vmatpush1.msra.mxu0 0.0
      %1879 = vmatprep.subr.mxu0 0.0
      %1880 = vmatpush1.msra.mxu0 0.0
      %1881 = vmatprep.subr.mxu0 0.0
      %1882 = vmatpush1.msra.mxu0 0.0
      %1883 = vmatprep.subr.mxu0 0.0
      %1884 = vmatpush1.msra.mxu0 0.0
      %1885 = vmatprep.subr.mxu0 0.0
      %1886 = vmatpush1.msra.mxu0 0.0
      %1887 = vmatprep.subr.mxu0 0.0
      %1888 = vmatpush1.msra.mxu0 0.0
      %1889 = vmatprep.subr.mxu0 0.0
      %1890 = vmatpush1.msra.mxu0 0.0
      %1891 = vmatprep.subr.mxu0 0.0
      %1892 = vmatpush1.msra.mxu0 0.0
      %1893 = vmatprep.subr.mxu0 0.0
      %1894 = vmatpush1.msra.mxu0 0.0
      %1895 = vmatprep.subr.mxu0 0.0
      %1896 = vmatpush1.msra.mxu0 0.0
      %1897 = vmatprep.subr.mxu0 0.0
      %1898 = vmatpush1.msra.mxu0 0.0
      %1899 = vmatprep.subr.mxu0 0.0
      %1900 = vmatpush1.msra.mxu0 0.0
      %1901 = vmatprep.subr.mxu0 0.0
      %1902 = vmatpush1.msra.mxu0 0.0
      %1903 = vmatprep.subr.mxu0 0.0
      %1904 = vmatpush1.msra.mxu0 0.0
      %1905 = vmatprep.subr.mxu0 0.0
      %1906 = vmatpush1.msra.mxu0 0.0
      %1907 = vmatprep.subr.mxu0 0.0
      %1908 = vmatpush1.msra.mxu0 0.0
      %1909 = vmatprep.subr.mxu0 0.0
      %1910 = vmatpush1.msra.mxu0 0.0
      %1911 = vmatprep.subr.mxu0 0.0
      %1912 = vmatpush1.msra.mxu0 0.0
      %1913 = vmatprep.subr.mxu0 0.0
      %1914 = vmatpush1.msra.mxu0 0.0
      %1915 = vmatprep.subr.mxu0 0.0
      %1916 = vmatpush1.msra.mxu0 0.0
      %1917 = vmatprep.subr.mxu0 0.0
      %1918 = vmatpush1.msra.mxu0 0.0
      %1919 = vmatprep.mubr.f32.mxu0 0.0
      %1920 = vmatmul.mubr.f32.gmra.mrb[0].mxu0 %v1850
      %v1921 = vpop.f32.mrb[0].mxu0
      %v1922 = vadd.f32 %v1847, %v1921
      %v1923 = vpop.f32.mrb[0].mxu0
      %1924 = vmatprep.mubr.f32.mxu0 0.0
      %1925 = vmatmul.mubr.f32.gmra.mrb[0].mxu0 %v1853
      %v1926 = vpop.f32.mrb[0].mxu0
      %v1927 = vadd.f32 %v1847, %v1926
      %v1928 = vpop.f32.mrb[0].mxu0
      %1929 = vdwg.mxu0
      %v1930 = vmax.f32 %v1922, 0.0
      %v1931 = vmax.f32 %v1927, 0.0
      %s1932 = scalar_lea.vmem %s8, 192
      %v1933 = vld [vmem:[%s1932] sm:$0xff]
      %v1934 = vld [vmem:[%s1932 + $0x8] sm:$0xff]
      %v1935 = vld [vmem:[%s1932 + $0x10] sm:$0xff]
      %v1936 = vld [vmem:[%s1932 + $0x18] sm:$0xff]
      %v1937 = vld [vmem:[%s1932 + $0x20] sm:$0xff]
      %v1938 = vld [vmem:[%s1932 + $0x28] sm:$0xff]
      %v1939 = vld [vmem:[%s1932 + $0x30] sm:$0xff]
      %v1940 = vld [vmem:[%s1932 + $0x38] sm:$0xff]
      %s1941 = scalar_lea.vmem %s10, 5
      %v1942 = vld [vmem:[%s1941] sm:$0x1]
      %1943 = vmatprep.subr.mxu0 0.0
      %1944 = vmatpush1.msra.mxu0 %v1930
      %1945 = vmatprep.subr.mxu0 0.0
      %1946 = vmatpush1.msra.mxu0 %v1931
      %1947 = vmatprep.subr.mxu0 0.0
      %1948 = vmatpush1.msra.mxu0 0.0
      %1949 = vmatprep.subr.mxu0 0.0
      %1950 = vmatpush1.msra.mxu0 0.0
      %1951 = vmatprep.subr.mxu0 0.0
      %1952 = vmatpush1.msra.mxu0 0.0
      %1953 = vmatprep.subr.mxu0 0.0
      %1954 = vmatpush1.msra.mxu0 0.0
      %1955 = vmatprep.subr.mxu0 0.0
      %1956 = vmatpush1.msra.mxu0 0.0
      %1957 = vmatprep.subr.mxu0 0.0
      %1958 = vmatpush1.msra.mxu0 0.0
      %1959 = vmatprep.subr.mxu0 0.0
      %1960 = vmatpush1.msra.mxu0 0.0
      %1961 = vmatprep.subr.mxu0 0.0
      %1962 = vmatpush1.msra.mxu0 0.0
      %1963 = vmatprep.subr.mxu0 0.0
      %1964 = vmatpush1.msra.mxu0 0.0
      %1965 = vmatprep.subr.mxu0 0.0
      %1966 = vmatpush1.msra.mxu0 0.0
      %1967 = vmatprep.subr.mxu0 0.0
      %1968 = vmatpush1.msra.mxu0 0.0
      %1969 = vmatprep.subr.mxu0 0.0
      %1970 = vmatpush1.msra.mxu0 0.0
      %1971 = vmatprep.subr.mxu0 0.0
      %1972 = vmatpush1.msra.mxu0 0.0
      %1973 = vmatprep.subr.mxu0 0.0
      %1974 = vmatpush1.msra.mxu0 0.0
      %1975 = vmatprep.subr.mxu0 0.0
      %1976 = vmatpush1.msra.mxu0 0.0
      %1977 = vmatprep.subr.mxu0 0.0
      %1978 = vmatpush1.msra.mxu0 0.0
      %1979 = vmatprep.subr.mxu0 0.0
      %1980 = vmatpush1.msra.mxu0 0.0
      %1981 = vmatprep.subr.mxu0 0.0
      %1982 = vmatpush1.msra.mxu0 0.0
      %1983 = vmatprep.subr.mxu0 0.0
      %1984 = vmatpush1.msra.mxu0 0.0
      %1985 = vmatprep.subr.mxu0 0.0
      %1986 = vmatpush1.msra.mxu0 0.0
      %1987 = vmatprep.subr.mxu0 0.0
      %1988 = vmatpush1.msra.mxu0 0.0
      %1989 = vmatprep.subr.mxu0 0.0
      %1990 = vmatpush1.msra.mxu0 0.0
      %1991 = vmatprep.subr.mxu0 0.0
      %1992 = vmatpush1.msra.mxu0 0.0
      %1993 = vmatprep.subr.mxu0 0.0
      %1994 = vmatpush1.msra.mxu0 0.0
      %1995 = vmatprep.subr.mxu0 0.0
      %1996 = vmatpush1.msra.mxu0 0.0
      %1997 = vmatprep.subr.mxu0 0.0
      %1998 = vmatpush1.msra.mxu0 0.0
      %1999 = vmatprep.subr.mxu0 0.0
      %2000 = vmatpush1.msra.mxu0 0.0
      %2001 = vmatprep.subr.mxu0 0.0
      %2002 = vmatpush1.msra.mxu0 0.0
      %2003 = vmatprep.subr.mxu0 0.0
      %2004 = vmatpush1.msra.mxu0 0.0
      %2005 = vmatprep.subr.mxu0 0.0
      %2006 = vmatpush1.msra.mxu0 0.0
      %2007 = vmatprep.mubr.f32.mxu0 0.0
      %2008 = vmatmul.mubr.f32.gmra.mrb[0].mxu0 %v1202
      %v2009 = vpop.f32.mrb[0].mxu0
      %v2010 = vadd.f32 0.0, %v2009
      %v2011 = vpop.f32.mrb[0].mxu0
      %2012 = vmatprep.mubr.f32.mxu0 0.0
      %2013 = vmatmul.mubr.f32.gmra.mrb[0].mxu0 %v1205
      %v2014 = vpop.f32.mrb[0].mxu0
      %v2015 = vadd.f32 0.0, %v2014
      %v2016 = vpop.f32.mrb[0].mxu0
      %2017 = vdwg.mxu0
      %2020 = vrot.lane.b32.xlu0 %v1930, 32
      %v2021 = vpop.permute.xlu0 %2020
      %2022 = vrot.lane.b32.xlu0 %v1931, 32
      %v2023 = vpop.permute.xlu0 %2022
      %v2026 = vsel %vm621, %v2010, %v2021
      %v2027 = vsel %vm621, %v2015, %v2023
      %v2029 = vlaneseq
      %v2030 = vshrl.u32 %v2029, 7
      %v2031 = vsub.s32 0, %v2030
      %v2032 = vrot.slane %v1942, %v2031
      %v2035 = vsel %vm1298, %v2026, 0
      %v2038 = vsel %vm1298, %v2027, 0
      %2040 = vmatprep.subr.mxu0 0.0
      %2041 = vmatpush1.msra.mxu0 %v1933
      %2042 = vmatprep.subr.mxu0 0.0
      %2043 = vmatpush1.msra.mxu0 %v1934
      %2044 = vmatprep.subr.mxu0 0.0
      %2045 = vmatpush1.msra.mxu0 %v1935
      %2046 = vmatprep.subr.mxu0 0.0
      %2047 = vmatpush1.msra.mxu0 %v1936
      %2048 = vmatprep.subr.mxu0 0.0
      %2049 = vmatpush1.msra.mxu0 %v1937
      %2050 = vmatprep.subr.mxu0 0.0
      %2051 = vmatpush1.msra.mxu0 %v1938
      %2052 = vmatprep.subr.mxu0 0.0
      %2053 = vmatpush1.msra.mxu0 %v1939
      %2054 = vmatprep.subr.mxu0 0.0
      %2055 = vmatpush1.msra.mxu0 %v1940
      %2056 = vmatprep.subr.mxu0 0.0
      %2057 = vmatpush1.msra.mxu0 0.0
      %2058 = vmatprep.subr.mxu0 0.0
      %2059 = vmatpush1.msra.mxu0 0.0
      %2060 = vmatprep.subr.mxu0 0.0
      %2061 = vmatpush1.msra.mxu0 0.0
      %2062 = vmatprep.subr.mxu0 0.0
      %2063 = vmatpush1.msra.mxu0 0.0
      %2064 = vmatprep.subr.mxu0 0.0
      %2065 = vmatpush1.msra.mxu0 0.0
      %2066 = vmatprep.subr.mxu0 0.0
      %2067 = vmatpush1.msra.mxu0 0.0
      %2068 = vmatprep.subr.mxu0 0.0
      %2069 = vmatpush1.msra.mxu0 0.0
      %2070 = vmatprep.subr.mxu0 0.0
      %2071 = vmatpush1.msra.mxu0 0.0
      %2072 = vmatprep.subr.mxu0 0.0
      %2073 = vmatpush1.msra.mxu0 0.0
      %2074 = vmatprep.subr.mxu0 0.0
      %2075 = vmatpush1.msra.mxu0 0.0
      %2076 = vmatprep.subr.mxu0 0.0
      %2077 = vmatpush1.msra.mxu0 0.0
      %2078 = vmatprep.subr.mxu0 0.0
      %2079 = vmatpush1.msra.mxu0 0.0
      %2080 = vmatprep.subr.mxu0 0.0
      %2081 = vmatpush1.msra.mxu0 0.0
      %2082 = vmatprep.subr.mxu0 0.0
      %2083 = vmatpush1.msra.mxu0 0.0
      %2084 = vmatprep.subr.mxu0 0.0
      %2085 = vmatpush1.msra.mxu0 0.0
      %2086 = vmatprep.subr.mxu0 0.0
      %2087 = vmatpush1.msra.mxu0 0.0
      %2088 = vmatprep.subr.mxu0 0.0
      %2089 = vmatpush1.msra.mxu0 0.0
      %2090 = vmatprep.subr.mxu0 0.0
      %2091 = vmatpush1.msra.mxu0 0.0
      %2092 = vmatprep.subr.mxu0 0.0
      %2093 = vmatpush1.msra.mxu0 0.0
      %2094 = vmatprep.subr.mxu0 0.0
      %2095 = vmatpush1.msra.mxu0 0.0
      %2096 = vmatprep.subr.mxu0 0.0
      %2097 = vmatpush1.msra.mxu0 0.0
      %2098 = vmatprep.subr.mxu0 0.0
      %2099 = vmatpush1.msra.mxu0 0.0
      %2100 = vmatprep.subr.mxu0 0.0
      %2101 = vmatpush1.msra.mxu0 0.0
      %2102 = vmatprep.subr.mxu0 0.0
      %2103 = vmatpush1.msra.mxu0 0.0
      %2104 = vmatprep.mubr.f32.mxu0 0.0
      %2105 = vmatmul.mubr.f32.gmra.mrb[0].mxu0 %v2035
      %v2106 = vpop.f32.mrb[0].mxu0
      %v2107 = vadd.f32 %v2032, %v2106
      %v2108 = vpop.f32.mrb[0].mxu0
      %2109 = vmatprep.mubr.f32.mxu0 0.0
      %2110 = vmatmul.mubr.f32.gmra.mrb[0].mxu0 %v2038
      %v2111 = vpop.f32.mrb[0].mxu0
      %v2112 = vadd.f32 %v2032, %v2111
      %v2113 = vpop.f32.mrb[0].mxu0
      %2114 = vdwg.mxu0
      %s2115 = scalar_lea.vmem %s8, 256
      %v2116 = vld [vmem:[%s2115] sm:$0xff]
      %v2117 = vld [vmem:[%s2115 + $0x8] sm:$0xff]
      %v2118 = vld [vmem:[%s2115 + $0x10] sm:$0xff]
      %v2119 = vld [vmem:[%s2115 + $0x18] sm:$0xff]
      %v2120 = vld [vmem:[%s2115 + $0x20] sm:$0xff]
      %v2121 = vld [vmem:[%s2115 + $0x28] sm:$0xff]
      %v2122 = vld [vmem:[%s2115 + $0x30] sm:$0xff]
      %v2123 = vld [vmem:[%s2115 + $0x38] sm:$0xff]
      %s2124 = scalar_lea.vmem %s10, 6
      %v2125 = vld [vmem:[%s2124] sm:$0x1]
      %2128 = vrot.lane.b32.xlu0 %v1557, 32
      %v2129 = vpop.permute.xlu0 %2128
      %2130 = vrot.lane.b32.xlu0 %v1562, 32
      %v2131 = vpop.permute.xlu0 %2130
      %v2134 = vsel %vm621, %v2107, %v2129
      %v2135 = vsel %vm621, %v2112, %v2131
      %v2137 = vlaneseq
      %v2138 = vshrl.u32 %v2137, 7
      %v2139 = vsub.s32 0, %v2138
      %v2140 = vrot.slane %v2125, %v2139
      %v2143 = vsel %vm1298, %v2134, 0
      %v2146 = vsel %vm1298, %v2135, 0
      %2148 = vmatprep.subr.mxu0 0.0
      %2149 = vmatpush1.msra.mxu0 %v2116
      %2150 = vmatprep.subr.mxu0 0.0
      %2151 = vmatpush1.msra.mxu0 %v2117
      %2152 = vmatprep.subr.mxu0 0.0
      %2153 = vmatpush1.msra.mxu0 %v2118
      %2154 = vmatprep.subr.mxu0 0.0
      %2155 = vmatpush1.msra.mxu0 %v2119
      %2156 = vmatprep.subr.mxu0 0.0
      %2157 = vmatpush1.msra.mxu0 %v2120
      %2158 = vmatprep.subr.mxu0 0.0
      %2159 = vmatpush1.msra.mxu0 %v2121
      %2160 = vmatprep.subr.mxu0 0.0
      %2161 = vmatpush1.msra.mxu0 %v2122
      %2162 = vmatprep.subr.mxu0 0.0
      %2163 = vmatpush1.msra.mxu0 %v2123
      %2164 = vmatprep.subr.mxu0 0.0
      %2165 = vmatpush1.msra.mxu0 0.0
      %2166 = vmatprep.subr.mxu0 0.0
      %2167 = vmatpush1.msra.mxu0 0.0
      %2168 = vmatprep.subr.mxu0 0.0
      %2169 = vmatpush1.msra.mxu0 0.0
      %2170 = vmatprep.subr.mxu0 0.0
      %2171 = vmatpush1.msra.mxu0 0.0
      %2172 = vmatprep.subr.mxu0 0.0
      %2173 = vmatpush1.msra.mxu0 0.0
      %2174 = vmatprep.subr.mxu0 0.0
      %2175 = vmatpush1.msra.mxu0 0.0
      %2176 = vmatprep.subr.mxu0 0.0
      %2177 = vmatpush1.msra.mxu0 0.0
      %2178 = vmatprep.subr.mxu0 0.0
      %2179 = vmatpush1.msra.mxu0 0.0
      %2180 = vmatprep.subr.mxu0 0.0
      %2181 = vmatpush1.msra.mxu0 0.0
      %2182 = vmatprep.subr.mxu0 0.0
      %2183 = vmatpush1.msra.mxu0 0.0
      %2184 = vmatprep.subr.mxu0 0.0
      %2185 = vmatpush1.msra.mxu0 0.0
      %2186 = vmatprep.subr.mxu0 0.0
      %2187 = vmatpush1.msra.mxu0 0.0
      %2188 = vmatprep.subr.mxu0 0.0
      %2189 = vmatpush1.msra.mxu0 0.0
      %2190 = vmatprep.subr.mxu0 0.0
      %2191 = vmatpush1.msra.mxu0 0.0
      %2192 = vmatprep.subr.mxu0 0.0
      %2193 = vmatpush1.msra.mxu0 0.0
      %2194 = vmatprep.subr.mxu0 0.0
      %2195 = vmatpush1.msra.mxu0 0.0
      %2196 = vmatprep.subr.mxu0 0.0
      %2197 = vmatpush1.msra.mxu0 0.0
      %2198 = vmatprep.subr.mxu0 0.0
      %2199 = vmatpush1.msra.mxu0 0.0
      %2200 = vmatprep.subr.mxu0 0.0
      %2201 = vmatpush1.msra.mxu0 0.0
      %2202 = vmatprep.subr.mxu0 0.0
      %2203 = vmatpush1.msra.mxu0 0.0
      %2204 = vmatprep.subr.mxu0 0.0
      %2205 = vmatpush1.msra.mxu0 0.0
      %2206 = vmatprep.subr.mxu0 0.0
      %2207 = vmatpush1.msra.mxu0 0.0
      %2208 = vmatprep.subr.mxu0 0.0
      %2209 = vmatpush1.msra.mxu0 0.0
      %2210 = vmatprep.subr.mxu0 0.0
      %2211 = vmatpush1.msra.mxu0 0.0
      %2212 = vmatprep.mubr.f32.mxu0 0.0
      %2213 = vmatmul.mubr.f32.gmra.mrb[0].mxu0 %v2143
      %v2214 = vpop.f32.mrb[0].mxu0
      %v2215 = vadd.f32 %v2140, %v2214
      %v2216 = vpop.f32.mrb[0].mxu0
      %2217 = vmatprep.mubr.f32.mxu0 0.0
      %2218 = vmatmul.mubr.f32.gmra.mrb[0].mxu0 %v2146
      %v2219 = vpop.f32.mrb[0].mxu0
      %v2220 = vadd.f32 %v2140, %v2219
      %v2221 = vpop.f32.mrb[0].mxu0
      %2222 = vdwg.mxu0
      %v2223 = vxor.u32 %v2215, 2147483648
      %v2224 = vxor.u32 %v2220, 2147483648
      %v2225 = vmul.f32 %v2223, 1.442695
      %v2226 = vpow.pop %v2225
      %v2227 = vmul.f32 %v2224, 1.442695
      %v2228 = vpow.pop %v2227
      %v2229 = vadd.f32 %v2226, 1.0
      %v2230 = vadd.f32 %v2228, 1.0
      %v2231 = vrcp.pop %v2229
      %v2232 = vmul.f32 1.0, %v2231
      %v2233 = vrcp.pop %v2230
      %v2234 = vmul.f32 1.0, %v2233
      %v2235 = vmul.f32 %v2232, %v2107
      %v2236 = vmul.f32 %v2234, %v2112
      %v2237 = vsub.f32 1.0, %v2232
      %v2238 = vsub.f32 1.0, %v2234
      %v2239 = vmul.f32 %v2237, %v1557
      %v2240 = vmul.f32 %v2238, %v1562
      %v2241 = vadd.f32 %v2235, %v2239
      %v2242 = vadd.f32 %v2236, %v2240
      %v2243 = vld [vmem:[%s11] sm:$0xff]
      %v2244 = vld [vmem:[%s11 + $0x8] sm:$0xff]
      %v2245 = vld [vmem:[%s11 + $0x10] sm:$0xff]
      %v2246 = vld [vmem:[%s11 + $0x18] sm:$0xff]
      %v2248 = vsel %vm621, %v2241, 0
      %v2251 = vsel %vm621, %v2242, 0
      %2253 = vmatprep.subr.mxu0 0.0
      %2254 = vmatpush1.msra.mxu0 %v2243
      %2255 = vmatprep.subr.mxu0 0.0
      %2256 = vmatpush1.msra.mxu0 %v2244
      %2257 = vmatprep.subr.mxu0 0.0
      %2258 = vmatpush1.msra.mxu0 %v2245
      %2259 = vmatprep.subr.mxu0 0.0
      %2260 = vmatpush1.msra.mxu0 %v2246
      %2261 = vmatprep.subr.mxu0 0.0
      %2262 = vmatpush1.msra.mxu0 0.0
      %2263 = vmatprep.subr.mxu0 0.0
      %2264 = vmatpush1.msra.mxu0 0.0
      %2265 = vmatprep.subr.mxu0 0.0
      %2266 = vmatpush1.msra.mxu0 0.0
      %2267 = vmatprep.subr.mxu0 0.0
      %2268 = vmatpush1.msra.mxu0 0.0
      %2269 = vmatprep.subr.mxu0 0.0
      %2270 = vmatpush1.msra.mxu0 0.0
      %2271 = vmatprep.subr.mxu0 0.0
      %2272 = vmatpush1.msra.mxu0 0.0
      %2273 = vmatprep.subr.mxu0 0.0
      %2274 = vmatpush1.msra.mxu0 0.0
      %2275 = vmatprep.subr.mxu0 0.0
      %2276 = vmatpush1.msra.mxu0 0.0
      %2277 = vmatprep.subr.mxu0 0.0
      %2278 = vmatpush1.msra.mxu0 0.0
      %2279 = vmatprep.subr.mxu0 0.0
      %2280 = vmatpush1.msra.mxu0 0.0
      %2281 = vmatprep.subr.mxu0 0.0
      %2282 = vmatpush1.msra.mxu0 0.0
      %2283 = vmatprep.subr.mxu0 0.0
      %2284 = vmatpush1.msra.mxu0 0.0
      %2285 = vmatprep.subr.mxu0 0.0
      %2286 = vmatpush1.msra.mxu0 0.0
      %2287 = vmatprep.subr.mxu0 0.0
      %2288 = vmatpush1.msra.mxu0 0.0
      %2289 = vmatprep.subr.mxu0 0.0
      %2290 = vmatpush1.msra.mxu0 0.0
      %2291 = vmatprep.subr.mxu0 0.0
      %2292 = vmatpush1.msra.mxu0 0.0
      %2293 = vmatprep.subr.mxu0 0.0
      %2294 = vmatpush1.msra.mxu0 0.0
      %2295 = vmatprep.subr.mxu0 0.0
      %2296 = vmatpush1.msra.mxu0 0.0
      %2297 = vmatprep.subr.mxu0 0.0
      %2298 = vmatpush1.msra.mxu0 0.0
      %2299 = vmatprep.subr.mxu0 0.0
      %2300 = vmatpush1.msra.mxu0 0.0
      %2301 = vmatprep.subr.mxu0 0.0
      %2302 = vmatpush1.msra.mxu0 0.0
      %2303 = vmatprep.subr.mxu0 0.0
      %2304 = vmatpush1.msra.mxu0 0.0
      %2305 = vmatprep.subr.mxu0 0.0
      %2306 = vmatpush1.msra.mxu0 0.0
      %2307 = vmatprep.subr.mxu0 0.0
      %2308 = vmatpush1.msra.mxu0 0.0
      %2309 = vmatprep.subr.mxu0 0.0
      %2310 = vmatpush1.msra.mxu0 0.0
      %2311 = vmatprep.subr.mxu0 0.0
      %2312 = vmatpush1.msra.mxu0 0.0
      %2313 = vmatprep.subr.mxu0 0.0
      %2314 = vmatpush1.msra.mxu0 0.0
      %2315 = vmatprep.subr.mxu0 0.0
      %2316 = vmatpush1.msra.mxu0 0.0
      %2317 = vmatprep.mubr.f32.mxu0 0.0
      %2318 = vmatmul.mubr.f32.gmra.mrb[0].mxu0 %v2248
      %v2319 = vpop.f32.mrb[0].mxu0
      %v2320 = vadd.f32 0.0, %v2319
      %v2321 = vpop.f32.mrb[0].mxu0
      %2322 = vmatprep.mubr.f32.mxu0 0.0
      %2323 = vmatmul.mubr.f32.gmra.mrb[0].mxu0 %v2251
      %v2324 = vpop.f32.mrb[0].mxu0
      %v2325 = vadd.f32 0.0, %v2324
      %v2326 = vpop.f32.mrb[0].mxu0
      %2327 = vdwg.mxu0
      %vm2328 = vcmask 64512
      %v2329 = vsel %vm2328, %v2320, -inf
      %2330 = vmax.xlane.f32.xlu0 %v2329
      %v2331 = vpop.xlane.xlu0 %2330
      %v2332 = vsel %vm2328, %v2325, -inf
      %2333 = vmax.xlane.f32.xlu0 %v2332
      %v2334 = vpop.xlane.xlu0 %2333
      %v2335 = vsub.f32 %v2320, %v2331
      %v2336 = vsub.f32 %v2325, %v2334
      %v2337 = vmul.f32 %v2335, 1.442695
      %v2338 = vpow.pop %v2337
      %v2339 = vmul.f32 %v2336, 1.442695
      %v2340 = vpow.pop %v2339
      %v2341 = vsel %vm2328, %v2338, 0.0
      %2342 = vadd.xlane.f32.xlu0 %v2341
      %v2343 = vpop.xlane.xlu0 %2342
      %v2344 = vsel %vm2328, %v2340, 0.0
      %2345 = vadd.xlane.f32.xlu0 %v2344
      %v2346 = vpop.xlane.xlu0 %2345
      %v2347 = vlog2.pop %v2343
      %v2348 = vmul.f32 %v2347, 0.6931472
      %v2349 = vlog2.pop %v2346
      %v2350 = vmul.f32 %v2349, 0.6931472
      %v2351 = vsub.f32 %v2335, %v2348
      %v2352 = vsub.f32 %v2336, %v2350
      %2353 = vst.msk [vmem:[%s493] sm:$0xff] %vm2328, %v2351
      %2354 = vst.msk [vmem:[%s493 + $0x8] sm:$0xff] %vm2328, %v2352
      %p2355 = scmp.lt.s32.totalorder %s23, 1
      %s2356 = scalar_select %p2355, %s23, 1
      %s2357 = smul.addr %s2356, 2
      %s2358 = smul.addr %s2357, 8
      %s2359 = scalar_lea.vmem %s12, %s2358
      // Predicated region
      $region69: #{tpu_custom_call.1} parent=67 // pred_check
        %p2360 = pneg %p318
      $region70: #{tpu_custom_call.1} parent=67 // pred_check_branch
        %2362 = sbr.rel (%p2360) target = $region72
      $region71: #{tpu_custom_call.1} parent=67 // pred_region
        _
      $region72: #{tpu_custom_call.1} parent=67 // pred_fallthru
        _
    $region68: #{tpu_custom_call.1} parent=5 // pred_fallthru
      _
    %p2363 = scmp.le.s32.totalorder 2, %s18
    // Predicated region
    $region73: #{tpu_custom_call.1} parent=5 // pred_check
      %p2364 = pneg %p2363
    $region74: #{tpu_custom_call.1} parent=5 // pred_check_branch
      %2366 = sbr.rel (%p2364) target = $region76
    $region75: #{tpu_custom_call.1} parent=5 // pred_region
      %s2367 = ssub.s32 %s18, 2
      // Predicated region
      $region77: #{tpu_custom_call.1} parent=75 // pred_check
        %p2368 = pneg %p324
      $region78: #{tpu_custom_call.1} parent=75 // pred_check_branch
        %2370 = sbr.rel (%p2368) target = $region80
      $region79: #{tpu_custom_call.1} parent=75 // pred_region
        %p2371 = scmp.lt.s32.totalorder %s24, 1
        %s2372 = scalar_select %p2371, %s24, 1
        %s2373 = smul.addr %s2372, 2
        %s2374 = smul.addr %s2373, 8
        %s2375 = scalar_lea.vmem %s12, %s2374
      $region80: #{tpu_custom_call.1} parent=75 // pred_fallthru
        _
    $region76: #{tpu_custom_call.1} parent=5 // pred_fallthru
      _
  $region6: #{tpu_custom_call.1} parent=0 // loop_footer
    %s22 = sadd.s32 1, %s18
  $region7: #{tpu_custom_call.1} parent=0 // loop_footer_branch
    %17 = sbr.rel target = $region3
  $region8: #{tpu_custom_call.1} parent=0 // loop_exit
    _

</llo_original>
